<compile_context>
chip_gen: v7x
topology: tpu7x:2x2x1
jax: 0.10.0
libtpu: 0.0.40
codegen_flags: <defaults>
</compile_context>

<pallas_src>
import functools

import jax
import jax.numpy as jnp
from jax.experimental import pallas as pl
from jax.experimental.pallas import tpu as pltpu

LANE = 128          # lane width: pad feature dims to multiples of this
NODE_TILE = 256     # row / reduction tile over nodes
VMEM_LIMIT = 32 * 1024 * 1024


def _round_up(x, m):
    return ((x + m - 1) // m) * m


def _pad2(a, rows, cols):
    return jnp.pad(a, ((0, rows - a.shape[0]), (0, cols - a.shape[1])))


# ----------------------------------------------------------------------------
# Kernel 1: layer-0 plain MLP (no aggregation):  relu(relu(X @ W1) @ W2)
# ----------------------------------------------------------------------------
def mlp_kernel(x_ref, w1_ref, w2_ref, o_ref):
    h = jnp.dot(x_ref[...], w1_ref[...], preferred_element_type=jnp.float32)
    h = jnp.maximum(h, 0.0)
    h = jnp.dot(h.astype(w2_ref.dtype), w2_ref[...],
                preferred_element_type=jnp.float32)
    h = jnp.maximum(h, 0.0)
    o_ref[...] = h.astype(o_ref.dtype)


def mlp_layer(x, w1, w2, *, node_tile=NODE_TILE):
    n_pad, f_in = x.shape
    h_out = w2.shape[1]
    return pl.pallas_call(
        mlp_kernel,
        out_shape=jax.ShapeDtypeStruct((n_pad, h_out), jnp.bfloat16),
        grid=(n_pad // node_tile,),
        in_specs=[
            pl.BlockSpec((node_tile, f_in), lambda i: (i, 0)),
            pl.BlockSpec((f_in, h_out), lambda i: (0, 0)),
            pl.BlockSpec((h_out, h_out), lambda i: (0, 0)),
        ],
        out_specs=pl.BlockSpec((node_tile, h_out), lambda i: (i, 0)),
        compiler_params=pltpu.CompilerParams(
            dimension_semantics=("parallel",),
            vmem_limit_bytes=VMEM_LIMIT),
    )(x, w1, w2)


# ----------------------------------------------------------------------------
# Kernel 2: conv layer (i > 0):  relu(relu((A @ X) @ W1) @ W2)
#   Tiled A @ X reduction with f32 accumulator, MLP applied on the finished
#   row tile at the last reduction step.
# ----------------------------------------------------------------------------
def conv_mlp_kernel(a_ref, x_ref, w1_ref, w2_ref, o_ref, acc_ref):
    k = pl.program_id(1)

    @pl.when(k == 0)
    def _():
        acc_ref[...] = jnp.zeros_like(acc_ref)

    acc_ref[...] += jnp.dot(a_ref[...], x_ref[...],
                            preferred_element_type=jnp.float32)

    @pl.when(k == pl.num_programs(1) - 1)
    def _():
        agg = acc_ref[...]
        h = jnp.dot(agg.astype(w1_ref.dtype), w1_ref[...],
                    preferred_element_type=jnp.float32)
        h = jnp.maximum(h, 0.0)
        h = jnp.dot(h.astype(w2_ref.dtype), w2_ref[...],
                    preferred_element_type=jnp.float32)
        h = jnp.maximum(h, 0.0)
        o_ref[...] = h.astype(o_ref.dtype)


def conv_layer(a, x, w1, w2, *, node_tile=NODE_TILE):
    n_pad = a.shape[0]
    f_in = x.shape[1]
    h_out = w2.shape[1]
    grid = (n_pad // node_tile, n_pad // node_tile)
    return pl.pallas_call(
        conv_mlp_kernel,
        out_shape=jax.ShapeDtypeStruct((n_pad, h_out), jnp.bfloat16),
        grid=grid,
        in_specs=[
            pl.BlockSpec((node_tile, node_tile), lambda i, k: (i, k)),
            pl.BlockSpec((node_tile, f_in), lambda i, k: (k, 0)),
            pl.BlockSpec((f_in, h_out), lambda i, k: (0, 0)),
            pl.BlockSpec((h_out, h_out), lambda i, k: (0, 0)),
        ],
        out_specs=pl.BlockSpec((node_tile, h_out), lambda i, k: (i, 0)),
        scratch_shapes=[pltpu.VMEM((node_tile, f_in), jnp.float32)],
        compiler_params=pltpu.CompilerParams(
            dimension_semantics=("parallel", "arbitrary"),
            vmem_limit_bytes=VMEM_LIMIT),
    )(a, x, w1, w2)


# ----------------------------------------------------------------------------
# Kernel 3: global_add_pool + out linear + softmax(out - max) + clamp.
#   pooled accumulated over node tiles; head applied on the last tile.
#   Padded target columns carry bias = -1e9 so they vanish in the softmax.
# ----------------------------------------------------------------------------
def pool_head_kernel(s_ref, x_ref, w_ref, b_ref, o_ref, acc_ref):
    k = pl.program_id(0)

    @pl.when(k == 0)
    def _():
        acc_ref[...] = jnp.zeros_like(acc_ref)

    acc_ref[...] += jnp.dot(s_ref[...], x_ref[...],
                            preferred_element_type=jnp.float32)

    @pl.when(k == pl.num_programs(0) - 1)
    def _():
        pooled = acc_ref[...]
        logits = jnp.dot(pooled.astype(w_ref.dtype), w_ref[...],
                         preferred_element_type=jnp.float32)
        logits = logits + b_ref[...]
        m = jnp.max(logits, axis=-1, keepdims=True)
        e = jnp.exp(logits - m)
        denom = jnp.sum(e, axis=-1, keepdims=True)
        p = e * pl.reciprocal(denom, approx=True)
        o_ref[...] = jnp.clip(p, 1e-8, 1.0).astype(o_ref.dtype)


def pool_head(s, x, w_out, b_out, *, node_tile=NODE_TILE):
    g_pad, n_pad = s.shape
    h_in = x.shape[1]
    t_out = w_out.shape[1]
    return pl.pallas_call(
        pool_head_kernel,
        out_shape=jax.ShapeDtypeStruct((g_pad, t_out), jnp.float32),
        grid=(n_pad // node_tile,),
        in_specs=[
            pl.BlockSpec((g_pad, node_tile), lambda k: (0, k)),
            pl.BlockSpec((node_tile, h_in), lambda k: (k, 0)),
            pl.BlockSpec((h_in, t_out), lambda k: (0, 0)),
            pl.BlockSpec((1, t_out), lambda k: (0, 0)),
        ],
        out_specs=pl.BlockSpec((g_pad, t_out), lambda k: (0, 0)),
        scratch_shapes=[pltpu.VMEM((g_pad, h_in), jnp.float32)],
        compiler_params=pltpu.CompilerParams(
            dimension_semantics=("arbitrary",),
            vmem_limit_bytes=VMEM_LIMIT),
    )(s, x, w_out, b_out)


# ----------------------------------------------------------------------------
# GMDNTransition in JAX (params + glue) calling the Pallas kernels.
# ----------------------------------------------------------------------------
def init_params(key, dim_node_features, dim_target, hidden_units, num_layers):
    """Deterministic parameter init (Linear layers, bias=False except final out)."""
    params = {"layers": []}
    for i in range(num_layers):
        dim_in = dim_node_features if i == 0 else hidden_units
        key, k1, k2 = jax.random.split(key, 3)
        w1 = jax.random.normal(k1, (dim_in, hidden_units), jnp.float32) * 0.1
        w2 = jax.random.normal(k2, (hidden_units, hidden_units), jnp.float32) * 0.1
        params["layers"].append((w1, w2))
    key, k3, k4, k5 = jax.random.split(key, 4)
    # fc_global exists in the PyTorch module but is unused in forward(); kept for parity.
    params["fc_global_w"] = jax.random.normal(
        k3, (hidden_units * num_layers, hidden_units), jnp.float32) * 0.1
    params["out_w"] = jax.random.normal(k4, (hidden_units, dim_target), jnp.float32) * 0.1
    params["out_b"] = jax.random.normal(k5, (dim_target,), jnp.float32) * 0.1
    return params


def build_adjacency(edge_index, num_nodes, aggr="sum"):
    """Dense A[dst, src] so that (A @ X)[i] = aggr_{j -> i} X[j]."""
    # TODO(synk): for large sparse graphs replace with a scalar-prefetch gather /
    # segment-sum formulation (O(E*F) traffic instead of O(N^2)).
    src, dst = edge_index[0], edge_index[1]
    a = jnp.zeros((num_nodes, num_nodes), jnp.float32)
    a = a.at[dst, src].add(1.0)
    if aggr == "mean":
        deg = jnp.maximum(a.sum(axis=1, keepdims=True), 1.0)
        a = a / deg
    return a


def gmdn_transition_forward(params, x, edge_index, edge_attr, batch, num_graphs,
                            neighborhood_aggregation="sum"):
    # TODO(synk): use_edge_attr=False — edge_attr message transform path not implemented.
    del edge_attr
    n, f = x.shape
    hidden = params["layers"][0][1].shape[0]
    t = params["out_w"].shape[1]

    n_pad = _round_up(n, NODE_TILE)
    f_pad = _round_up(f, LANE)
    h_pad = _round_up(hidden, LANE)
    g_pad = _round_up(num_graphs, 8)
    t_pad = _round_up(t, LANE)

    # Node features + dense adjacency, zero-padded, bf16 operands for the MXU.
    x_p = _pad2(x, n_pad, f_pad).astype(jnp.bfloat16)
    adj = build_adjacency(edge_index, n, neighborhood_aggregation)
    adj_p = _pad2(adj, n_pad, n_pad).astype(jnp.bfloat16)

    outs = []
    h = None
    for i, (w1, w2) in enumerate(params["layers"]):
        in_dim = f_pad if i == 0 else h_pad
        w1_p = _pad2(w1, in_dim, h_pad).astype(jnp.bfloat16)
        w2_p = _pad2(w2, h_pad, h_pad).astype(jnp.bfloat16)
        if i == 0:
            h = mlp_layer(x_p, w1_p, w2_p)          # layer 0: plain MLP, no A matmul
        else:
            h = conv_layer(adj_p, h, w1_p, w2_p)    # GMDNConv: aggr then MLP (fused)
        outs.append(h)

    node_embeddings = jnp.concatenate(
        [o[:n, :hidden] for o in outs], axis=1).astype(jnp.float32)

    # global_add_pool as one-hot selector matmul, fused with out-linear + softmax + clamp.
    sel = (batch[None, :] == jnp.arange(num_graphs, dtype=batch.dtype)[:, None])
    s_p = _pad2(sel.astype(jnp.float32), g_pad, n_pad).astype(jnp.bfloat16)
    w_out_p = _pad2(params["out_w"], h_pad, t_pad).astype(jnp.bfloat16)
    b_out_p = jnp.full((1, t_pad), -1e9, jnp.float32).at[0, :t].set(params["out_b"])

    mix = pool_head(s_p, h, w_out_p, b_out_p)
    mixing_weights = mix[:num_graphs, :t]
    return mixing_weights, node_embeddings


def reference_forward(params, x, edge_index, batch, num_graphs, aggr="sum"):
    """Pure-JAX f32 reference (matches the PyTorch forward)."""
    n = x.shape[0]
    adj = build_adjacency(edge_index, n, aggr)
    h = x
    outs = []
    for i, (w1, w2) in enumerate(params["layers"]):
        inp = h if i == 0 else adj @ h
        h = jax.nn.relu(jax.nn.relu(inp @ w1) @ w2)
        outs.append(h)
    node_emb = jnp.concatenate(outs, axis=1)
    sel = (batch[None, :] == jnp.arange(num_graphs)[:, None]).astype(jnp.float32)
    pooled = sel @ h
    logits = pooled @ params["out_w"] + params["out_b"]
    z = logits - logits.max(axis=-1, keepdims=True)
    p = jax.nn.softmax(z, axis=-1)
    return jnp.clip(p, 1e-8, 1.0), node_emb


if __name__ == "__main__":
    # Small synthetic graph batch.
    dim_node_features = 12
    dim_edge_features = 4     # unused (use_edge_attr=False)
    dim_target = 5
    hidden_units = 32
    num_layers = 3
    num_nodes = 10
    num_edges = 20
    num_graphs = 2

    key = jax.random.PRNGKey(0)
    key, kx, ke = jax.random.split(key, 3)

    x = jax.random.normal(kx, (num_nodes, dim_node_features), jnp.float32)
    edge_index = jax.random.randint(ke, (2, num_edges), 0, num_nodes, jnp.int32)
    edge_attr = jnp.zeros((num_edges, dim_edge_features), jnp.float32)
    batch = jnp.concatenate([
        jnp.zeros((num_nodes // 2,), jnp.int32),
        jnp.ones((num_nodes - num_nodes // 2,), jnp.int32),
    ])

    params = init_params(key, dim_node_features, dim_target, hidden_units, num_layers)

    fwd = jax.jit(gmdn_transition_forward,
                  static_argnames=("num_graphs", "neighborhood_aggregation"))
    mixing_weights, node_embeddings = fwd(
        params, x, edge_index, edge_attr, batch,
        num_graphs=num_graphs, neighborhood_aggregation="sum")
    jax.block_until_ready((mixing_weights, node_embeddings))

    # Shape / range checks.
    assert mixing_weights.shape == (num_graphs, dim_target)
    assert node_embeddings.shape == (num_nodes, hidden_units * num_layers)
    assert jnp.all(mixing_weights >= 1e-8) and jnp.all(mixing_weights <= 1.0)
    # approx reciprocal + bf16 operands: tolerance relaxed vs exact-f32 path.
    assert jnp.allclose(mixing_weights.sum(axis=-1), 1.0, atol=1e-2)

    # Numerical check against a pure-JAX f32 reference (bf16 MXU operands -> loose tol).
    mix_ref, emb_ref = reference_forward(params, x, edge_index, batch, num_graphs, "sum")
    assert jnp.allclose(mixing_weights, mix_ref, atol=3e-2), (
        "mixing_weights mismatch vs reference")
    assert jnp.allclose(node_embeddings, emb_ref, atol=3e-2, rtol=5e-2), (
        "node_embeddings mismatch vs reference")

    print("KERNEL_OK")
</pallas_src>

<mosaic_0001>
module attributes {stable_mosaic.version = 11 : i64} {
  func.func @mlp_kernel(%arg0: i32, %arg1: memref<256x128xbf16, #tpu.memory_space<vmem>>, %arg2: memref<128x128xbf16, #tpu.memory_space<vmem>>, %arg3: memref<128x128xbf16, #tpu.memory_space<vmem>>, %arg4: memref<256x128xbf16, #tpu.memory_space<vmem>>) attributes {dimension_semantics = [#tpu.dimension_semantics<parallel>], iteration_bounds = array<i64: 1>, scalar_prefetch = 0 : i64, scratch_operands = 0 : i64, tpu.core_type = #tpu.core_type<tc>, window_params = [{transform_indices = @transform_0, window_bounds = array<i64: 256, 128>}, {pipeline_mode = #tpu.pipeline_mode<synchronous>, transform_indices = @transform_1, window_bounds = array<i64: 128, 128>}, {pipeline_mode = #tpu.pipeline_mode<synchronous>, transform_indices = @transform_2, window_bounds = array<i64: 128, 128>}, {transform_indices = @transform_3, window_bounds = array<i64: 256, 128>}]} {
    %c0 = arith.constant 0 : index
    %c0_0 = arith.constant 0 : index
    %0 = vector.load %arg1[%c0, %c0_0] : memref<256x128xbf16, #tpu.memory_space<vmem>>, vector<256x128xbf16>
    %c0_1 = arith.constant 0 : index
    %c0_2 = arith.constant 0 : index
    %1 = vector.load %arg2[%c0_1, %c0_2] : memref<128x128xbf16, #tpu.memory_space<vmem>>, vector<128x128xbf16>
    %cst = arith.constant dense<0.000000e+00> : vector<256x128xf32>
    %2 = tpu.matmul %0, %1, %cst {dimension_numbers = #tpu.dot_dimension_numbers<[1], [0], [0], [1], [0, 0, 1, 1], [], []>} : vector<256x128xbf16>, vector<128x128xbf16>, vector<256x128xf32> -> vector<256x128xf32>
    %cst_3 = arith.constant 0.000000e+00 : f32
    %3 = vector.broadcast %cst_3 : f32 to vector<256x128xf32>
    %4 = arith.maximumf %2, %3 : vector<256x128xf32>
    %5 = arith.truncf %4 : vector<256x128xf32> to vector<256x128xbf16>
    %c0_4 = arith.constant 0 : index
    %c0_5 = arith.constant 0 : index
    %6 = vector.load %arg3[%c0_4, %c0_5] : memref<128x128xbf16, #tpu.memory_space<vmem>>, vector<128x128xbf16>
    %cst_6 = arith.constant dense<0.000000e+00> : vector<256x128xf32>
    %7 = tpu.matmul %5, %6, %cst_6 {dimension_numbers = #tpu.dot_dimension_numbers<[1], [0], [0], [1], [0, 0, 1, 1], [], []>} : vector<256x128xbf16>, vector<128x128xbf16>, vector<256x128xf32> -> vector<256x128xf32>
    %cst_7 = arith.constant 0.000000e+00 : f32
    %8 = vector.broadcast %cst_7 : f32 to vector<256x128xf32>
    %9 = arith.maximumf %7, %8 : vector<256x128xf32>
    %10 = arith.truncf %9 : vector<256x128xf32> to vector<256x128xbf16>
    %c0_8 = arith.constant 0 : index
    %c0_9 = arith.constant 0 : index
    %11 = vector.load %arg4[%c0_8, %c0_9] : memref<256x128xbf16, #tpu.memory_space<vmem>>, vector<256x128xbf16>
    tpu.vector_store %arg4[%c0_8, %c0_9], %10 {strides = array<i32>} : memref<256x128xbf16, #tpu.memory_space<vmem>>, vector<256x128xbf16>,
    return
  }
  func.func @transform_0(%arg0: i32) -> (i32, i32) {
    %c0_i32 = arith.constant 0 : i32
    %c0_i32_0 = arith.constant 0 : i32
    return %arg0, %c0_i32 : i32, i32
  }
  func.func @transform_1(%arg0: i32) -> (i32, i32) {
    %c0_i32 = arith.constant 0 : i32
    %c0_i32_0 = arith.constant 0 : i32
    %c0_i32_1 = arith.constant 0 : i32
    return %c0_i32, %c0_i32_0 : i32, i32
  }
  func.func @transform_2(%arg0: i32) -> (i32, i32) {
    %c0_i32 = arith.constant 0 : i32
    %c0_i32_0 = arith.constant 0 : i32
    %c0_i32_1 = arith.constant 0 : i32
    return %c0_i32, %c0_i32_0 : i32, i32
  }
  func.func @transform_3(%arg0: i32) -> (i32, i32) {
    %c0_i32 = arith.constant 0 : i32
    %c0_i32_0 = arith.constant 0 : i32
    return %arg0, %c0_i32 : i32, i32
  }
}

module attributes {stable_mosaic.version = 11 : i64} {
  func.func @conv_mlp_kernel(%arg0: i32, %arg1: i32, %arg2: memref<256x256xbf16, #tpu.memory_space<vmem>>, %arg3: memref<256x128xbf16, #tpu.memory_space<vmem>>, %arg4: memref<128x128xbf16, #tpu.memory_space<vmem>>, %arg5: memref<128x128xbf16, #tpu.memory_space<vmem>>, %arg6: memref<256x128xbf16, #tpu.memory_space<vmem>>, %arg7: memref<256x128xf32, #tpu.memory_space<vmem>>) attributes {dimension_semantics = [#tpu.dimension_semantics<parallel>, #tpu.dimension_semantics<arbitrary>], iteration_bounds = array<i64: 1, 1>, scalar_prefetch = 0 : i64, scratch_operands = 1 : i64, tpu.core_type = #tpu.core_type<tc>, window_params = [{transform_indices = @transform_0, window_bounds = array<i64: 256, 256>}, {transform_indices = @transform_1, window_bounds = array<i64: 256, 128>}, {pipeline_mode = #tpu.pipeline_mode<synchronous>, transform_indices = @transform_2, window_bounds = array<i64: 128, 128>}, {pipeline_mode = #tpu.pipeline_mode<synchronous>, transform_indices = @transform_3, window_bounds = array<i64: 128, 128>}, {transform_indices = @transform_4, window_bounds = array<i64: 256, 128>}]} {
    %c0_i32 = arith.constant 0 : i32
    %0 = arith.cmpi eq, %arg1, %c0_i32 : i32
    %1 = arith.extui %0 : i1 to i32
    %c0_i32_0 = arith.constant 0 : i32
    %2 = arith.cmpi ne, %1, %c0_i32_0 : i32
    scf.if %2 {
      %cst_10 = arith.constant 0.000000e+00 : f32
      %12 = vector.broadcast %cst_10 : f32 to vector<256x128xf32>
      %c0_11 = arith.constant 0 : index
      %c0_12 = arith.constant 0 : index
      %13 = vector.load %arg7[%c0_11, %c0_12] : memref<256x128xf32, #tpu.memory_space<vmem>>, vector<256x128xf32>
      tpu.vector_store %arg7[%c0_11, %c0_12], %12 {strides = array<i32>} : memref<256x128xf32, #tpu.memory_space<vmem>>, vector<256x128xf32>,
    } else {
    }
    %c0 = arith.constant 0 : index
    %c0_1 = arith.constant 0 : index
    %3 = vector.load %arg7[%c0, %c0_1] : memref<256x128xf32, #tpu.memory_space<vmem>>, vector<256x128xf32>
    %c0_2 = arith.constant 0 : index
    %c0_3 = arith.constant 0 : index
    %4 = vector.load %arg2[%c0_2, %c0_3] : memref<256x256xbf16, #tpu.memory_space<vmem>>, vector<256x256xbf16>
    %c0_4 = arith.constant 0 : index
    %c0_5 = arith.constant 0 : index
    %5 = vector.load %arg3[%c0_4, %c0_5] : memref<256x128xbf16, #tpu.memory_space<vmem>>, vector<256x128xbf16>
    %cst = arith.constant dense<0.000000e+00> : vector<256x128xf32>
    %6 = tpu.matmul %4, %5, %cst {dimension_numbers = #tpu.dot_dimension_numbers<[1], [0], [0], [1], [0, 0, 1, 1], [], []>} : vector<256x256xbf16>, vector<256x128xbf16>, vector<256x128xf32> -> vector<256x128xf32>
    %7 = arith.addf %3, %6 : vector<256x128xf32>
    %c0_6 = arith.constant 0 : index
    %c0_7 = arith.constant 0 : index
    %8 = vector.load %arg7[%c0_6, %c0_7] : memref<256x128xf32, #tpu.memory_space<vmem>>, vector<256x128xf32>
    tpu.vector_store %arg7[%c0_6, %c0_7], %7 {strides = array<i32>} : memref<256x128xf32, #tpu.memory_space<vmem>>, vector<256x128xf32>,
    %c0_i32_8 = arith.constant 0 : i32
    %9 = arith.cmpi eq, %arg1, %c0_i32_8 : i32
    %10 = arith.extui %9 : i1 to i32
    %c0_i32_9 = arith.constant 0 : i32
    %11 = arith.cmpi ne, %10, %c0_i32_9 : i32
    scf.if %11 {
      %c0_10 = arith.constant 0 : index
      %c0_11 = arith.constant 0 : index
      %12 = vector.load %arg7[%c0_10, %c0_11] : memref<256x128xf32, #tpu.memory_space<vmem>>, vector<256x128xf32>
      %13 = arith.truncf %12 : vector<256x128xf32> to vector<256x128xbf16>
      %c0_12 = arith.constant 0 : index
      %c0_13 = arith.constant 0 : index
      %14 = vector.load %arg4[%c0_12, %c0_13] : memref<128x128xbf16, #tpu.memory_space<vmem>>, vector<128x128xbf16>
      %cst_14 = arith.constant dense<0.000000e+00> : vector<256x128xf32>
      %15 = tpu.matmul %13, %14, %cst_14 {dimension_numbers = #tpu.dot_dimension_numbers<[1], [0], [0], [1], [0, 0, 1, 1], [], []>} : vector<256x128xbf16>, vector<128x128xbf16>, vector<256x128xf32> -> vector<256x128xf32>
      %cst_15 = arith.constant 0.000000e+00 : f32
      %16 = vector.broadcast %cst_15 : f32 to vector<256x128xf32>
      %17 = arith.maximumf %15, %16 : vector<256x128xf32>
      %18 = arith.truncf %17 : vector<256x128xf32> to vector<256x128xbf16>
      %c0_16 = arith.constant 0 : index
      %c0_17 = arith.constant 0 : index
      %19 = vector.load %arg5[%c0_16, %c0_17] : memref<128x128xbf16, #tpu.memory_space<vmem>>, vector<128x128xbf16>
      %cst_18 = arith.constant dense<0.000000e+00> : vector<256x128xf32>
      %20 = tpu.matmul %18, %19, %cst_18 {dimension_numbers = #tpu.dot_dimension_numbers<[1], [0], [0], [1], [0, 0, 1, 1], [], []>} : vector<256x128xbf16>, vector<128x128xbf16>, vector<256x128xf32> -> vector<256x128xf32>
      %cst_19 = arith.constant 0.000000e+00 : f32
      %21 = vector.broadcast %cst_19 : f32 to vector<256x128xf32>
      %22 = arith.maximumf %20, %21 : vector<256x128xf32>
      %23 = arith.truncf %22 : vector<256x128xf32> to vector<256x128xbf16>
      %c0_20 = arith.constant 0 : index
      %c0_21 = arith.constant 0 : index
      %24 = vector.load %arg6[%c0_20, %c0_21] : memref<256x128xbf16, #tpu.memory_space<vmem>>, vector<256x128xbf16>
      tpu.vector_store %arg6[%c0_20, %c0_21], %23 {strides = array<i32>} : memref<256x128xbf16, #tpu.memory_space<vmem>>, vector<256x128xbf16>,
    } else {
    }
    return
  }
  func.func @transform_0(%arg0: i32, %arg1: i32) -> (i32, i32) {
    %c0_i32 = arith.constant 0 : i32
    return %arg0, %arg1 : i32, i32
  }
  func.func @transform_1(%arg0: i32, %arg1: i32) -> (i32, i32) {
    %c0_i32 = arith.constant 0 : i32
    %c0_i32_0 = arith.constant 0 : i32
    return %arg1, %c0_i32 : i32, i32
  }
  func.func @transform_2(%arg0: i32, %arg1: i32) -> (i32, i32) {
    %c0_i32 = arith.constant 0 : i32
    %c0_i32_0 = arith.constant 0 : i32
    %c0_i32_1 = arith.constant 0 : i32
    return %c0_i32, %c0_i32_0 : i32, i32
  }
  func.func @transform_3(%arg0: i32, %arg1: i32) -> (i32, i32) {
    %c0_i32 = arith.constant 0 : i32
    %c0_i32_0 = arith.constant 0 : i32
    %c0_i32_1 = arith.constant 0 : i32
    return %c0_i32, %c0_i32_0 : i32, i32
  }
  func.func @transform_4(%arg0: i32, %arg1: i32) -> (i32, i32) {
    %c0_i32 = arith.constant 0 : i32
    %c0_i32_0 = arith.constant 0 : i32
    return %arg0, %c0_i32 : i32, i32
  }
}

module attributes {stable_mosaic.version = 11 : i64} {
  func.func @pool_head_kernel(%arg0: i32, %arg1: memref<8x256xbf16, #tpu.memory_space<vmem>>, %arg2: memref<256x128xbf16, #tpu.memory_space<vmem>>, %arg3: memref<128x128xbf16, #tpu.memory_space<vmem>>, %arg4: memref<1x128xf32, #tpu.memory_space<vmem>>, %arg5: memref<8x128xf32, #tpu.memory_space<vmem>>, %arg6: memref<8x128xf32, #tpu.memory_space<vmem>>) attributes {dimension_semantics = [#tpu.dimension_semantics<arbitrary>], iteration_bounds = array<i64: 1>, scalar_prefetch = 0 : i64, scratch_operands = 1 : i64, tpu.core_type = #tpu.core_type<tc>, window_params = [{transform_indices = @transform_0, window_bounds = array<i64: 8, 256>}, {transform_indices = @transform_1, window_bounds = array<i64: 256, 128>}, {pipeline_mode = #tpu.pipeline_mode<synchronous>, transform_indices = @transform_2, window_bounds = array<i64: 128, 128>}, {pipeline_mode = #tpu.pipeline_mode<synchronous>, transform_indices = @transform_3, window_bounds = array<i64: 1, 128>}, {pipeline_mode = #tpu.pipeline_mode<synchronous>, transform_indices = @transform_4, window_bounds = array<i64: 8, 128>}]} {
    %c0_i32 = arith.constant 0 : i32
    %0 = arith.cmpi eq, %arg0, %c0_i32 : i32
    %1 = arith.extui %0 : i1 to i32
    %c0_i32_0 = arith.constant 0 : i32
    %2 = arith.cmpi ne, %1, %c0_i32_0 : i32
    scf.if %2 {
      %cst_10 = arith.constant 0.000000e+00 : f32
      %12 = vector.broadcast %cst_10 : f32 to vector<8x128xf32>
      %c0_11 = arith.constant 0 : index
      %c0_12 = arith.constant 0 : index
      %13 = vector.load %arg6[%c0_11, %c0_12] : memref<8x128xf32, #tpu.memory_space<vmem>>, vector<8x128xf32>
      tpu.vector_store %arg6[%c0_11, %c0_12], %12 {strides = array<i32>} : memref<8x128xf32, #tpu.memory_space<vmem>>, vector<8x128xf32>,
    } else {
    }
    %c0 = arith.constant 0 : index
    %c0_1 = arith.constant 0 : index
    %3 = vector.load %arg6[%c0, %c0_1] : memref<8x128xf32, #tpu.memory_space<vmem>>, vector<8x128xf32>
    %c0_2 = arith.constant 0 : index
    %c0_3 = arith.constant 0 : index
    %4 = vector.load %arg1[%c0_2, %c0_3] : memref<8x256xbf16, #tpu.memory_space<vmem>>, vector<8x256xbf16>
    %c0_4 = arith.constant 0 : index
    %c0_5 = arith.constant 0 : index
    %5 = vector.load %arg2[%c0_4, %c0_5] : memref<256x128xbf16, #tpu.memory_space<vmem>>, vector<256x128xbf16>
    %cst = arith.constant dense<0.000000e+00> : vector<8x128xf32>
    %6 = tpu.matmul %4, %5, %cst {dimension_numbers = #tpu.dot_dimension_numbers<[1], [0], [0], [1], [0, 0, 1, 1], [], []>} : vector<8x256xbf16>, vector<256x128xbf16>, vector<8x128xf32> -> vector<8x128xf32>
    %7 = arith.addf %3, %6 : vector<8x128xf32>
    %c0_6 = arith.constant 0 : index
    %c0_7 = arith.constant 0 : index
    %8 = vector.load %arg6[%c0_6, %c0_7] : memref<8x128xf32, #tpu.memory_space<vmem>>, vector<8x128xf32>
    tpu.vector_store %arg6[%c0_6, %c0_7], %7 {strides = array<i32>} : memref<8x128xf32, #tpu.memory_space<vmem>>, vector<8x128xf32>,
    %c0_i32_8 = arith.constant 0 : i32
    %9 = arith.cmpi eq, %arg0, %c0_i32_8 : i32
    %10 = arith.extui %9 : i1 to i32
    %c0_i32_9 = arith.constant 0 : i32
    %11 = arith.cmpi ne, %10, %c0_i32_9 : i32
    scf.if %11 {
      %c0_10 = arith.constant 0 : index
      %c0_11 = arith.constant 0 : index
      %12 = vector.load %arg6[%c0_10, %c0_11] : memref<8x128xf32, #tpu.memory_space<vmem>>, vector<8x128xf32>
      %13 = arith.truncf %12 : vector<8x128xf32> to vector<8x128xbf16>
      %c0_12 = arith.constant 0 : index
      %c0_13 = arith.constant 0 : index
      %14 = vector.load %arg3[%c0_12, %c0_13] : memref<128x128xbf16, #tpu.memory_space<vmem>>, vector<128x128xbf16>
      %cst_14 = arith.constant dense<0.000000e+00> : vector<8x128xf32>
      %15 = tpu.matmul %13, %14, %cst_14 {dimension_numbers = #tpu.dot_dimension_numbers<[1], [0], [0], [1], [0, 0, 1, 1], [], []>} : vector<8x128xbf16>, vector<128x128xbf16>, vector<8x128xf32> -> vector<8x128xf32>
      %c0_15 = arith.constant 0 : index
      %c0_16 = arith.constant 0 : index
      %16 = vector.load %arg4[%c0_15, %c0_16] : memref<1x128xf32, #tpu.memory_space<vmem>>, vector<1x128xf32>
      %17 = vector.broadcast %16 : vector<1x128xf32> to vector<8x128xf32>
      %18 = arith.addf %15, %17 : vector<8x128xf32>
      %cst_17 = arith.constant dense<0xFF800000> : vector<8xf32>
      %19 = vector.multi_reduction <maximumf>, %18, %cst_17 [1] : vector<8x128xf32> to vector<8xf32>
      %20 = vector.shape_cast %19 : vector<8xf32> to vector<8x1xf32>
      %21 = vector.broadcast %20 : vector<8x1xf32> to vector<8x128xf32>
      %22 = arith.subf %18, %21 : vector<8x128xf32>
      %23 = math.exp %22 : vector<8x128xf32>
      %cst_18 = arith.constant dense<0.000000e+00> : vector<8xf32>
      %24 = vector.multi_reduction <add>, %23, %cst_18 [1] : vector<8x128xf32> to vector<8xf32>
      %25 = vector.shape_cast %24 : vector<8xf32> to vector<8x1xf32>
      %26 = tpu.reciprocal %25 {approx = true} : vector<8x1xf32> -> vector<8x1xf32>
      %27 = vector.broadcast %26 : vector<8x1xf32> to vector<8x128xf32>
      %28 = arith.mulf %23, %27 : vector<8x128xf32>
      %cst_19 = arith.constant 9.99999993E-9 : f32
      %cst_20 = arith.constant 1.000000e+00 : f32
      %29 = vector.broadcast %cst_19 : f32 to vector<8x128xf32>
      %30 = arith.maximumf %29, %28 : vector<8x128xf32>
      %31 = vector.broadcast %cst_20 : f32 to vector<8x128xf32>
      %32 = arith.minimumf %31, %30 : vector<8x128xf32>
      %c0_21 = arith.constant 0 : index
      %c0_22 = arith.constant 0 : index
      %33 = vector.load %arg5[%c0_21, %c0_22] : memref<8x128xf32, #tpu.memory_space<vmem>>, vector<8x128xf32>
      tpu.vector_store %arg5[%c0_21, %c0_22], %32 {strides = array<i32>} : memref<8x128xf32, #tpu.memory_space<vmem>>, vector<8x128xf32>,
    } else {
    }
    return
  }
  func.func @transform_0(%arg0: i32) -> (i32, i32) {
    %c0_i32 = arith.constant 0 : i32
    %c0_i32_0 = arith.constant 0 : i32
    return %c0_i32, %arg0 : i32, i32
  }
  func.func @transform_1(%arg0: i32) -> (i32, i32) {
    %c0_i32 = arith.constant 0 : i32
    %c0_i32_0 = arith.constant 0 : i32
    return %arg0, %c0_i32 : i32, i32
  }
  func.func @transform_2(%arg0: i32) -> (i32, i32) {
    %c0_i32 = arith.constant 0 : i32
    %c0_i32_0 = arith.constant 0 : i32
    %c0_i32_1 = arith.constant 0 : i32
    return %c0_i32, %c0_i32_0 : i32, i32
  }
  func.func @transform_3(%arg0: i32) -> (i32, i32) {
    %c0_i32 = arith.constant 0 : i32
    %c0_i32_0 = arith.constant 0 : i32
    %c0_i32_1 = arith.constant 0 : i32
    return %c0_i32, %c0_i32_0 : i32, i32
  }
  func.func @transform_4(%arg0: i32) -> (i32, i32) {
    %c0_i32 = arith.constant 0 : i32
    %c0_i32_0 = arith.constant 0 : i32
    %c0_i32_1 = arith.constant 0 : i32
    return %c0_i32, %c0_i32_0 : i32, i32
  }
}

</mosaic_0001>

<llo_original>
// kernel: gmdn_transition_forward.4
$region0: #{gmdn_transition_forward.4}
  #allocation0 [shape = 'u32[]', space=smem, size = 0x4, offset = 0x4, fixed_abs, tag = 'smem constant byte address 0x4 - core index']
  #allocation1 [shape = 'u32[144,128]{1,0:T(1,128)}', space=vmem, size = 0x12000, scoped, tag = 'internal scratch']
  %s0 = inlined_call_operand.vmem [shape: bf16[256,128], index: 0, kind: input, shape index: {}]
  %s1 = inlined_call_operand.vmem [shape: bf16[128,128], index: 1, kind: input, shape index: {}]
  %s2 = inlined_call_operand.vmem [shape: bf16[128,128], index: 2, kind: input, shape index: {}]
  %s3 = inlined_call_operand.vmem [shape: bf16[256,128], index: 3, kind: output, shape index: {}]
  %s4 = sld [smem:[#allocation0]]
  $region22: #{gmdn_transition_forward.4} parent=0
    _
  %s6 = ssub.s32 1, %s4
  %s7 = scalar_select 0, %s6, %s4
  // Predicated region
  $region2: #{gmdn_transition_forward.4} parent=0 // pred_check
    _
  $region3: #{gmdn_transition_forward.4} parent=0 // pred_check_branch
    %9 = sbr.rel (0) target = $region5
  $region4: #{gmdn_transition_forward.4} parent=0 // pred_region
    _
  $region5: #{gmdn_transition_forward.4} parent=0 // pred_fallthru
    _
  // Predicated region
  $region6: #{gmdn_transition_forward.4} parent=0 // pred_check
    _
  $region7: #{gmdn_transition_forward.4} parent=0 // pred_check_branch
    %11 = sbr.rel (0) target = $region9
  $region8: #{gmdn_transition_forward.4} parent=0 // pred_region
    _
  $region9: #{gmdn_transition_forward.4} parent=0 // pred_fallthru
    _
  // Predicated region
  $region10: #{gmdn_transition_forward.4} parent=0 // pred_check
    _
  $region11: #{gmdn_transition_forward.4} parent=0 // pred_check_branch
    %13 = sbr.rel (0) target = $region13
  $region12: #{gmdn_transition_forward.4} parent=0 // pred_region
    _
  $region13: #{gmdn_transition_forward.4} parent=0 // pred_fallthru
    _
  %v15 = vld [vmem:[%s0] sm:$0xf]
  %v16 = vld [vmem:[%s0 + $0x4] sm:$0xf]
  %v17 = vld [vmem:[%s0 + $0x8] sm:$0xf]
  %v18 = vld [vmem:[%s0 + $0xc] sm:$0xf]
  %v19 = vld [vmem:[%s0 + $0x10] sm:$0xf]
  %v20 = vld [vmem:[%s0 + $0x14] sm:$0xf]
  %v21 = vld [vmem:[%s0 + $0x18] sm:$0xf]
  %v22 = vld [vmem:[%s0 + $0x1c] sm:$0xf]
  %v23 = vld [vmem:[%s0 + $0x20] sm:$0xf]
  %v24 = vld [vmem:[%s0 + $0x24] sm:$0xf]
  %v25 = vld [vmem:[%s0 + $0x28] sm:$0xf]
  %v26 = vld [vmem:[%s0 + $0x2c] sm:$0xf]
  %v27 = vld [vmem:[%s0 + $0x30] sm:$0xf]
  %v28 = vld [vmem:[%s0 + $0x34] sm:$0xf]
  %v29 = vld [vmem:[%s0 + $0x38] sm:$0xf]
  %v30 = vld [vmem:[%s0 + $0x3c] sm:$0xf]
  %v31 = vld [vmem:[%s0 + $0x40] sm:$0xf]
  %v32 = vld [vmem:[%s0 + $0x44] sm:$0xf]
  %v33 = vld [vmem:[%s0 + $0x48] sm:$0xf]
  %v34 = vld [vmem:[%s0 + $0x4c] sm:$0xf]
  %v35 = vld [vmem:[%s0 + $0x50] sm:$0xf]
  %v36 = vld [vmem:[%s0 + $0x54] sm:$0xf]
  %v37 = vld [vmem:[%s0 + $0x58] sm:$0xf]
  %v38 = vld [vmem:[%s0 + $0x5c] sm:$0xf]
  %v39 = vld [vmem:[%s0 + $0x60] sm:$0xf]
  %v40 = vld [vmem:[%s0 + $0x64] sm:$0xf]
  %v41 = vld [vmem:[%s0 + $0x68] sm:$0xf]
  %v42 = vld [vmem:[%s0 + $0x6c] sm:$0xf]
  %v43 = vld [vmem:[%s0 + $0x70] sm:$0xf]
  %v44 = vld [vmem:[%s0 + $0x74] sm:$0xf]
  %v45 = vld [vmem:[%s0 + $0x78] sm:$0xf]
  %v46 = vld [vmem:[%s0 + $0x7c] sm:$0xf]
  %v47 = vld [vmem:[%s1] sm:$0xf]
  %v48 = vld [vmem:[%s1 + $0x4] sm:$0xf]
  %v49 = vld [vmem:[%s1 + $0x8] sm:$0xf]
  %v50 = vld [vmem:[%s1 + $0xc] sm:$0xf]
  %v51 = vld [vmem:[%s1 + $0x10] sm:$0xf]
  %v52 = vld [vmem:[%s1 + $0x14] sm:$0xf]
  %v53 = vld [vmem:[%s1 + $0x18] sm:$0xf]
  %v54 = vld [vmem:[%s1 + $0x1c] sm:$0xf]
  %v55 = vld [vmem:[%s1 + $0x20] sm:$0xf]
  %v56 = vld [vmem:[%s1 + $0x24] sm:$0xf]
  %v57 = vld [vmem:[%s1 + $0x28] sm:$0xf]
  %v58 = vld [vmem:[%s1 + $0x2c] sm:$0xf]
  %v59 = vld [vmem:[%s1 + $0x30] sm:$0xf]
  %v60 = vld [vmem:[%s1 + $0x34] sm:$0xf]
  %v61 = vld [vmem:[%s1 + $0x38] sm:$0xf]
  %v62 = vld [vmem:[%s1 + $0x3c] sm:$0xf]
  %v95 = vunpack.c.l.b16 %v15
  %v96 = vunpack.c.l.b16 %v16
  %v97 = vunpack.c.l.b16 %v17
  %v98 = vunpack.c.l.b16 %v18
  %v99 = vunpack.c.l.b16 %v19
  %v100 = vunpack.c.l.b16 %v20
  %v101 = vunpack.c.l.b16 %v21
  %v102 = vunpack.c.l.b16 %v22
  %v103 = vunpack.c.l.b16 %v23
  %v104 = vunpack.c.l.b16 %v24
  %v105 = vunpack.c.l.b16 %v25
  %v106 = vunpack.c.l.b16 %v26
  %v107 = vunpack.c.l.b16 %v27
  %v108 = vunpack.c.l.b16 %v28
  %v109 = vunpack.c.l.b16 %v29
  %v110 = vunpack.c.l.b16 %v30
  %v111 = vunpack.c.l.b16 %v31
  %v112 = vunpack.c.l.b16 %v32
  %v113 = vunpack.c.l.b16 %v33
  %v114 = vunpack.c.l.b16 %v34
  %v115 = vunpack.c.l.b16 %v35
  %v116 = vunpack.c.l.b16 %v36
  %v117 = vunpack.c.l.b16 %v37
  %v118 = vunpack.c.l.b16 %v38
  %v119 = vunpack.c.l.b16 %v39
  %v120 = vunpack.c.l.b16 %v40
  %v121 = vunpack.c.l.b16 %v41
  %v122 = vunpack.c.l.b16 %v42
  %v123 = vunpack.c.l.b16 %v43
  %v124 = vunpack.c.l.b16 %v44
  %v125 = vunpack.c.l.b16 %v45
  %v126 = vunpack.c.l.b16 %v46
  %v127 = vpack.c.b16 %v96, %v95
  %v128 = vpack.c.b16 %v98, %v97
  %v129 = vpack.c.b16 %v100, %v99
  %v130 = vpack.c.b16 %v102, %v101
  %v131 = vpack.c.b16 %v104, %v103
  %v132 = vpack.c.b16 %v106, %v105
  %v133 = vpack.c.b16 %v108, %v107
  %v134 = vpack.c.b16 %v110, %v109
  %v135 = vpack.c.b16 %v112, %v111
  %v136 = vpack.c.b16 %v114, %v113
  %v137 = vpack.c.b16 %v116, %v115
  %v138 = vpack.c.b16 %v118, %v117
  %v139 = vpack.c.b16 %v120, %v119
  %v140 = vpack.c.b16 %v122, %v121
  %v141 = vpack.c.b16 %v124, %v123
  %v142 = vpack.c.b16 %v126, %v125
  %v175 = vunpack.c.l.b16 %v47
  %v176 = vunpack.c.l.b16 %v48
  %v177 = vunpack.c.l.b16 %v49
  %v178 = vunpack.c.l.b16 %v50
  %v179 = vunpack.c.l.b16 %v51
  %v180 = vunpack.c.l.b16 %v52
  %v181 = vunpack.c.l.b16 %v53
  %v182 = vunpack.c.l.b16 %v54
  %v183 = vunpack.c.l.b16 %v55
  %v184 = vunpack.c.l.b16 %v56
  %v185 = vunpack.c.l.b16 %v57
  %v186 = vunpack.c.l.b16 %v58
  %v187 = vunpack.c.l.b16 %v59
  %v188 = vunpack.c.l.b16 %v60
  %v189 = vunpack.c.l.b16 %v61
  %v190 = vunpack.c.l.b16 %v62
  %v191 = vpack.c.b16 %v176, %v175
  %v192 = vpack.c.b16 %v178, %v177
  %v193 = vpack.c.b16 %v180, %v179
  %v194 = vpack.c.b16 %v182, %v181
  %v195 = vpack.c.b16 %v184, %v183
  %v196 = vpack.c.b16 %v186, %v185
  %v197 = vpack.c.b16 %v188, %v187
  %v198 = vpack.c.b16 %v190, %v189
  %207 = vmatprep.subr.bf16.mxu0 0
  %208 = vmatpush1.bf16.msra.mxu0 %v191
  %209 = vmatprep.subr.bf16.mxu0 0
  %210 = vmatpush1.bf16.msra.mxu0 %v192
  %211 = vmatprep.subr.bf16.mxu0 0
  %212 = vmatpush1.bf16.msra.mxu0 %v193
  %213 = vmatprep.subr.bf16.mxu0 0
  %214 = vmatpush1.bf16.msra.mxu0 %v194
  %215 = vmatprep.subr.bf16.mxu0 0
  %216 = vmatpush1.bf16.msra.mxu0 %v195
  %217 = vmatprep.subr.bf16.mxu0 0
  %218 = vmatpush1.bf16.msra.mxu0 %v196
  %219 = vmatprep.subr.bf16.mxu0 0
  %220 = vmatpush1.bf16.msra.mxu0 %v197
  %221 = vmatprep.subr.bf16.mxu0 0
  %222 = vmatpush1.bf16.msra.mxu0 %v198
  %223 = vmatprep.subr.bf16.mxu0 0
  %224 = vmatpush1.bf16.msra.mxu0 0
  %225 = vmatprep.subr.bf16.mxu0 0
  %226 = vmatpush1.bf16.msra.mxu0 0
  %227 = vmatprep.subr.bf16.mxu0 0
  %228 = vmatpush1.bf16.msra.mxu0 0
  %229 = vmatprep.subr.bf16.mxu0 0
  %230 = vmatpush1.bf16.msra.mxu0 0
  %231 = vmatprep.subr.bf16.mxu0 0
  %232 = vmatpush1.bf16.msra.mxu0 0
  %233 = vmatprep.subr.bf16.mxu0 0
  %234 = vmatpush1.bf16.msra.mxu0 0
  %235 = vmatprep.subr.bf16.mxu0 0
  %236 = vmatpush1.bf16.msra.mxu0 0
  %237 = vmatprep.subr.bf16.mxu0 0
  %238 = vmatpush1.bf16.msra.mxu0 0
  %239 = vmatprep.mubr.bf16.mxu0 0
  %240 = vmatmul.mubr.bf16.gmra.mrb[0].mxu0 %v127
  %v241 = vpop.f32.mrb[0].mxu0
  %v242 = vadd.f32 0.0, %v241
  %v243 = vpop.f32.mrb[0].mxu0
  %v244 = vpop.f32.mrb[0].mxu0
  %v245 = vadd.f32 0.0, %v244
  %v246 = vpop.f32.mrb[0].mxu0
  %247 = vmatprep.mubr.bf16.mxu0 0
  %248 = vmatmul.mubr.bf16.gmra.mrb[0].mxu0 %v128
  %v249 = vpop.f32.mrb[0].mxu0
  %v250 = vadd.f32 0.0, %v249
  %v251 = vpop.f32.mrb[0].mxu0
  %v252 = vpop.f32.mrb[0].mxu0
  %v253 = vadd.f32 0.0, %v252
  %v254 = vpop.f32.mrb[0].mxu0
  %255 = vmatprep.mubr.bf16.mxu0 0
  %256 = vmatmul.mubr.bf16.gmra.mrb[0].mxu0 %v129
  %v257 = vpop.f32.mrb[0].mxu0
  %v258 = vadd.f32 0.0, %v257
  %v259 = vpop.f32.mrb[0].mxu0
  %v260 = vpop.f32.mrb[0].mxu0
  %v261 = vadd.f32 0.0, %v260
  %v262 = vpop.f32.mrb[0].mxu0
  %263 = vmatprep.mubr.bf16.mxu0 0
  %264 = vmatmul.mubr.bf16.gmra.mrb[0].mxu0 %v130
  %v265 = vpop.f32.mrb[0].mxu0
  %v266 = vadd.f32 0.0, %v265
  %v267 = vpop.f32.mrb[0].mxu0
  %v268 = vpop.f32.mrb[0].mxu0
  %v269 = vadd.f32 0.0, %v268
  %v270 = vpop.f32.mrb[0].mxu0
  %271 = vmatprep.mubr.bf16.mxu0 0
  %272 = vmatmul.mubr.bf16.gmra.mrb[0].mxu0 %v131
  %v273 = vpop.f32.mrb[0].mxu0
  %v274 = vadd.f32 0.0, %v273
  %v275 = vpop.f32.mrb[0].mxu0
  %v276 = vpop.f32.mrb[0].mxu0
  %v277 = vadd.f32 0.0, %v276
  %v278 = vpop.f32.mrb[0].mxu0
  %279 = vmatprep.mubr.bf16.mxu0 0
  %280 = vmatmul.mubr.bf16.gmra.mrb[0].mxu0 %v132
  %v281 = vpop.f32.mrb[0].mxu0
  %v282 = vadd.f32 0.0, %v281
  %v283 = vpop.f32.mrb[0].mxu0
  %v284 = vpop.f32.mrb[0].mxu0
  %v285 = vadd.f32 0.0, %v284
  %v286 = vpop.f32.mrb[0].mxu0
  %287 = vmatprep.mubr.bf16.mxu0 0
  %288 = vmatmul.mubr.bf16.gmra.mrb[0].mxu0 %v133
  %v289 = vpop.f32.mrb[0].mxu0
  %v290 = vadd.f32 0.0, %v289
  %v291 = vpop.f32.mrb[0].mxu0
  %v292 = vpop.f32.mrb[0].mxu0
  %v293 = vadd.f32 0.0, %v292
  %v294 = vpop.f32.mrb[0].mxu0
  %295 = vmatprep.mubr.bf16.mxu0 0
  %296 = vmatmul.mubr.bf16.gmra.mrb[0].mxu0 %v134
  %v297 = vpop.f32.mrb[0].mxu0
  %v298 = vadd.f32 0.0, %v297
  %v299 = vpop.f32.mrb[0].mxu0
  %v300 = vpop.f32.mrb[0].mxu0
  %v301 = vadd.f32 0.0, %v300
  %v302 = vpop.f32.mrb[0].mxu0
  %303 = vmatprep.mubr.bf16.mxu0 0
  %304 = vmatmul.mubr.bf16.gmra.mrb[0].mxu0 %v135
  %v305 = vpop.f32.mrb[0].mxu0
  %v306 = vadd.f32 0.0, %v305
  %v307 = vpop.f32.mrb[0].mxu0
  %v308 = vpop.f32.mrb[0].mxu0
  %v309 = vadd.f32 0.0, %v308
  %v310 = vpop.f32.mrb[0].mxu0
  %311 = vmatprep.mubr.bf16.mxu0 0
  %312 = vmatmul.mubr.bf16.gmra.mrb[0].mxu0 %v136
  %v313 = vpop.f32.mrb[0].mxu0
  %v314 = vadd.f32 0.0, %v313
  %v315 = vpop.f32.mrb[0].mxu0
  %v316 = vpop.f32.mrb[0].mxu0
  %v317 = vadd.f32 0.0, %v316
  %v318 = vpop.f32.mrb[0].mxu0
  %319 = vmatprep.mubr.bf16.mxu0 0
  %320 = vmatmul.mubr.bf16.gmra.mrb[0].mxu0 %v137
  %v321 = vpop.f32.mrb[0].mxu0
  %v322 = vadd.f32 0.0, %v321
  %v323 = vpop.f32.mrb[0].mxu0
  %v324 = vpop.f32.mrb[0].mxu0
  %v325 = vadd.f32 0.0, %v324
  %v326 = vpop.f32.mrb[0].mxu0
  %327 = vmatprep.mubr.bf16.mxu0 0
  %328 = vmatmul.mubr.bf16.gmra.mrb[0].mxu0 %v138
  %v329 = vpop.f32.mrb[0].mxu0
  %v330 = vadd.f32 0.0, %v329
  %v331 = vpop.f32.mrb[0].mxu0
  %v332 = vpop.f32.mrb[0].mxu0
  %v333 = vadd.f32 0.0, %v332
  %v334 = vpop.f32.mrb[0].mxu0
  %335 = vmatprep.mubr.bf16.mxu0 0
  %336 = vmatmul.mubr.bf16.gmra.mrb[0].mxu0 %v139
  %v337 = vpop.f32.mrb[0].mxu0
  %v338 = vadd.f32 0.0, %v337
  %v339 = vpop.f32.mrb[0].mxu0
  %v340 = vpop.f32.mrb[0].mxu0
  %v341 = vadd.f32 0.0, %v340
  %v342 = vpop.f32.mrb[0].mxu0
  %343 = vmatprep.mubr.bf16.mxu0 0
  %344 = vmatmul.mubr.bf16.gmra.mrb[0].mxu0 %v140
  %v345 = vpop.f32.mrb[0].mxu0
  %v346 = vadd.f32 0.0, %v345
  %v347 = vpop.f32.mrb[0].mxu0
  %v348 = vpop.f32.mrb[0].mxu0
  %v349 = vadd.f32 0.0, %v348
  %v350 = vpop.f32.mrb[0].mxu0
  %351 = vmatprep.mubr.bf16.mxu0 0
  %352 = vmatmul.mubr.bf16.gmra.mrb[0].mxu0 %v141
  %v353 = vpop.f32.mrb[0].mxu0
  %v354 = vadd.f32 0.0, %v353
  %v355 = vpop.f32.mrb[0].mxu0
  %v356 = vpop.f32.mrb[0].mxu0
  %v357 = vadd.f32 0.0, %v356
  %v358 = vpop.f32.mrb[0].mxu0
  %359 = vmatprep.mubr.bf16.mxu0 0
  %360 = vmatmul.mubr.bf16.gmra.mrb[0].mxu0 %v142
  %v361 = vpop.f32.mrb[0].mxu0
  %v362 = vadd.f32 0.0, %v361
  %v363 = vpop.f32.mrb[0].mxu0
  %v364 = vpop.f32.mrb[0].mxu0
  %v365 = vadd.f32 0.0, %v364
  %v366 = vpop.f32.mrb[0].mxu0
  %367 = vdwg.mxu0
  %v368 = vmax.f32 %v242, 0.0
  %v369 = vmax.f32 %v245, 0.0
  %v370 = vmax.f32 %v250, 0.0
  %v371 = vmax.f32 %v253, 0.0
  %v372 = vmax.f32 %v258, 0.0
  %v373 = vmax.f32 %v261, 0.0
  %v374 = vmax.f32 %v266, 0.0
  %v375 = vmax.f32 %v269, 0.0
  %v376 = vmax.f32 %v274, 0.0
  %v377 = vmax.f32 %v277, 0.0
  %v378 = vmax.f32 %v282, 0.0
  %v379 = vmax.f32 %v285, 0.0
  %v380 = vmax.f32 %v290, 0.0
  %v381 = vmax.f32 %v293, 0.0
  %v382 = vmax.f32 %v298, 0.0
  %v383 = vmax.f32 %v301, 0.0
  %v384 = vmax.f32 %v306, 0.0
  %v385 = vmax.f32 %v309, 0.0
  %v386 = vmax.f32 %v314, 0.0
  %v387 = vmax.f32 %v317, 0.0
  %v388 = vmax.f32 %v322, 0.0
  %v389 = vmax.f32 %v325, 0.0
  %v390 = vmax.f32 %v330, 0.0
  %v391 = vmax.f32 %v333, 0.0
  %v392 = vmax.f32 %v338, 0.0
  %v393 = vmax.f32 %v341, 0.0
  %v394 = vmax.f32 %v346, 0.0
  %v395 = vmax.f32 %v349, 0.0
  %v396 = vmax.f32 %v354, 0.0
  %v397 = vmax.f32 %v357, 0.0
  %v398 = vmax.f32 %v362, 0.0
  %v399 = vmax.f32 %v365, 0.0
  %v400 = vpack.c.bf16 %v369, %v368
  %v401 = vpack.c.bf16 %v371, %v370
  %v402 = vpack.c.bf16 %v373, %v372
  %v403 = vpack.c.bf16 %v375, %v374
  %v404 = vpack.c.bf16 %v377, %v376
  %v405 = vpack.c.bf16 %v379, %v378
  %v406 = vpack.c.bf16 %v381, %v380
  %v407 = vpack.c.bf16 %v383, %v382
  %v408 = vpack.c.bf16 %v385, %v384
  %v409 = vpack.c.bf16 %v387, %v386
  %v410 = vpack.c.bf16 %v389, %v388
  %v411 = vpack.c.bf16 %v391, %v390
  %v412 = vpack.c.bf16 %v393, %v392
  %v413 = vpack.c.bf16 %v395, %v394
  %v414 = vpack.c.bf16 %v397, %v396
  %v415 = vpack.c.bf16 %v399, %v398
  %v416 = vld [vmem:[%s2] sm:$0xf]
  %v417 = vld [vmem:[%s2 + $0x4] sm:$0xf]
  %v418 = vld [vmem:[%s2 + $0x8] sm:$0xf]
  %v419 = vld [vmem:[%s2 + $0xc] sm:$0xf]
  %v420 = vld [vmem:[%s2 + $0x10] sm:$0xf]
  %v421 = vld [vmem:[%s2 + $0x14] sm:$0xf]
  %v422 = vld [vmem:[%s2 + $0x18] sm:$0xf]
  %v423 = vld [vmem:[%s2 + $0x1c] sm:$0xf]
  %v424 = vld [vmem:[%s2 + $0x20] sm:$0xf]
  %v425 = vld [vmem:[%s2 + $0x24] sm:$0xf]
  %v426 = vld [vmem:[%s2 + $0x28] sm:$0xf]
  %v427 = vld [vmem:[%s2 + $0x2c] sm:$0xf]
  %v428 = vld [vmem:[%s2 + $0x30] sm:$0xf]
  %v429 = vld [vmem:[%s2 + $0x34] sm:$0xf]
  %v430 = vld [vmem:[%s2 + $0x38] sm:$0xf]
  %v431 = vld [vmem:[%s2 + $0x3c] sm:$0xf]
  %v448 = vunpack.c.l.b16 %v416
  %v449 = vunpack.c.l.b16 %v417
  %v450 = vunpack.c.l.b16 %v418
  %v451 = vunpack.c.l.b16 %v419
  %v452 = vunpack.c.l.b16 %v420
  %v453 = vunpack.c.l.b16 %v421
  %v454 = vunpack.c.l.b16 %v422
  %v455 = vunpack.c.l.b16 %v423
  %v456 = vunpack.c.l.b16 %v424
  %v457 = vunpack.c.l.b16 %v425
  %v458 = vunpack.c.l.b16 %v426
  %v459 = vunpack.c.l.b16 %v427
  %v460 = vunpack.c.l.b16 %v428
  %v461 = vunpack.c.l.b16 %v429
  %v462 = vunpack.c.l.b16 %v430
  %v463 = vunpack.c.l.b16 %v431
  %v464 = vpack.c.b16 %v449, %v448
  %v465 = vpack.c.b16 %v451, %v450
  %v466 = vpack.c.b16 %v453, %v452
  %v467 = vpack.c.b16 %v455, %v454
  %v468 = vpack.c.b16 %v457, %v456
  %v469 = vpack.c.b16 %v459, %v458
  %v470 = vpack.c.b16 %v461, %v460
  %v471 = vpack.c.b16 %v463, %v462
  %480 = vmatprep.subr.bf16.mxu0 0
  %481 = vmatpush1.bf16.msra.mxu0 %v464
  %482 = vmatprep.subr.bf16.mxu0 0
  %483 = vmatpush1.bf16.msra.mxu0 %v465
  %484 = vmatprep.subr.bf16.mxu0 0
  %485 = vmatpush1.bf16.msra.mxu0 %v466
  %486 = vmatprep.subr.bf16.mxu0 0
  %487 = vmatpush1.bf16.msra.mxu0 %v467
  %488 = vmatprep.subr.bf16.mxu0 0
  %489 = vmatpush1.bf16.msra.mxu0 %v468
  %490 = vmatprep.subr.bf16.mxu0 0
  %491 = vmatpush1.bf16.msra.mxu0 %v469
  %492 = vmatprep.subr.bf16.mxu0 0
  %493 = vmatpush1.bf16.msra.mxu0 %v470
  %494 = vmatprep.subr.bf16.mxu0 0
  %495 = vmatpush1.bf16.msra.mxu0 %v471
  %496 = vmatprep.subr.bf16.mxu0 0
  %497 = vmatpush1.bf16.msra.mxu0 0
  %498 = vmatprep.subr.bf16.mxu0 0
  %499 = vmatpush1.bf16.msra.mxu0 0
  %500 = vmatprep.subr.bf16.mxu0 0
  %501 = vmatpush1.bf16.msra.mxu0 0
  %502 = vmatprep.subr.bf16.mxu0 0
  %503 = vmatpush1.bf16.msra.mxu0 0
  %504 = vmatprep.subr.bf16.mxu0 0
  %505 = vmatpush1.bf16.msra.mxu0 0
  %506 = vmatprep.subr.bf16.mxu0 0
  %507 = vmatpush1.bf16.msra.mxu0 0
  %508 = vmatprep.subr.bf16.mxu0 0
  %509 = vmatpush1.bf16.msra.mxu0 0
  %510 = vmatprep.subr.bf16.mxu0 0
  %511 = vmatpush1.bf16.msra.mxu0 0
  %512 = vmatprep.mubr.bf16.mxu0 0
  %513 = vmatmul.mubr.bf16.gmra.mrb[0].mxu0 %v400
  %v514 = vpop.f32.mrb[0].mxu0
  %v515 = vadd.f32 0.0, %v514
  %v516 = vpop.f32.mrb[0].mxu0
  %v517 = vpop.f32.mrb[0].mxu0
  %v518 = vadd.f32 0.0, %v517
  %v519 = vpop.f32.mrb[0].mxu0
  %520 = vmatprep.mubr.bf16.mxu0 0
  %521 = vmatmul.mubr.bf16.gmra.mrb[0].mxu0 %v401
  %v522 = vpop.f32.mrb[0].mxu0
  %v523 = vadd.f32 0.0, %v522
  %v524 = vpop.f32.mrb[0].mxu0
  %v525 = vpop.f32.mrb[0].mxu0
  %v526 = vadd.f32 0.0, %v525
  %v527 = vpop.f32.mrb[0].mxu0
  %528 = vmatprep.mubr.bf16.mxu0 0
  %529 = vmatmul.mubr.bf16.gmra.mrb[0].mxu0 %v402
  %v530 = vpop.f32.mrb[0].mxu0
  %v531 = vadd.f32 0.0, %v530
  %v532 = vpop.f32.mrb[0].mxu0
  %v533 = vpop.f32.mrb[0].mxu0
  %v534 = vadd.f32 0.0, %v533
  %v535 = vpop.f32.mrb[0].mxu0
  %536 = vmatprep.mubr.bf16.mxu0 0
  %537 = vmatmul.mubr.bf16.gmra.mrb[0].mxu0 %v403
  %v538 = vpop.f32.mrb[0].mxu0
  %v539 = vadd.f32 0.0, %v538
  %v540 = vpop.f32.mrb[0].mxu0
  %v541 = vpop.f32.mrb[0].mxu0
  %v542 = vadd.f32 0.0, %v541
  %v543 = vpop.f32.mrb[0].mxu0
  %544 = vmatprep.mubr.bf16.mxu0 0
  %545 = vmatmul.mubr.bf16.gmra.mrb[0].mxu0 %v404
  %v546 = vpop.f32.mrb[0].mxu0
  %v547 = vadd.f32 0.0, %v546
  %v548 = vpop.f32.mrb[0].mxu0
  %v549 = vpop.f32.mrb[0].mxu0
  %v550 = vadd.f32 0.0, %v549
  %v551 = vpop.f32.mrb[0].mxu0
  %552 = vmatprep.mubr.bf16.mxu0 0
  %553 = vmatmul.mubr.bf16.gmra.mrb[0].mxu0 %v405
  %v554 = vpop.f32.mrb[0].mxu0
  %v555 = vadd.f32 0.0, %v554
  %v556 = vpop.f32.mrb[0].mxu0
  %v557 = vpop.f32.mrb[0].mxu0
  %v558 = vadd.f32 0.0, %v557
  %v559 = vpop.f32.mrb[0].mxu0
  %560 = vmatprep.mubr.bf16.mxu0 0
  %561 = vmatmul.mubr.bf16.gmra.mrb[0].mxu0 %v406
  %v562 = vpop.f32.mrb[0].mxu0
  %v563 = vadd.f32 0.0, %v562
  %v564 = vpop.f32.mrb[0].mxu0
  %v565 = vpop.f32.mrb[0].mxu0
  %v566 = vadd.f32 0.0, %v565
  %v567 = vpop.f32.mrb[0].mxu0
  %568 = vmatprep.mubr.bf16.mxu0 0
  %569 = vmatmul.mubr.bf16.gmra.mrb[0].mxu0 %v407
  %v570 = vpop.f32.mrb[0].mxu0
  %v571 = vadd.f32 0.0, %v570
  %v572 = vpop.f32.mrb[0].mxu0
  %v573 = vpop.f32.mrb[0].mxu0
  %v574 = vadd.f32 0.0, %v573
  %v575 = vpop.f32.mrb[0].mxu0
  %576 = vmatprep.mubr.bf16.mxu0 0
  %577 = vmatmul.mubr.bf16.gmra.mrb[0].mxu0 %v408
  %v578 = vpop.f32.mrb[0].mxu0
  %v579 = vadd.f32 0.0, %v578
  %v580 = vpop.f32.mrb[0].mxu0
  %v581 = vpop.f32.mrb[0].mxu0
  %v582 = vadd.f32 0.0, %v581
  %v583 = vpop.f32.mrb[0].mxu0
  %584 = vmatprep.mubr.bf16.mxu0 0
  %585 = vmatmul.mubr.bf16.gmra.mrb[0].mxu0 %v409
  %v586 = vpop.f32.mrb[0].mxu0
  %v587 = vadd.f32 0.0, %v586
  %v588 = vpop.f32.mrb[0].mxu0
  %v589 = vpop.f32.mrb[0].mxu0
  %v590 = vadd.f32 0.0, %v589
  %v591 = vpop.f32.mrb[0].mxu0
  %592 = vmatprep.mubr.bf16.mxu0 0
  %593 = vmatmul.mubr.bf16.gmra.mrb[0].mxu0 %v410
  %v594 = vpop.f32.mrb[0].mxu0
  %v595 = vadd.f32 0.0, %v594
  %v596 = vpop.f32.mrb[0].mxu0
  %v597 = vpop.f32.mrb[0].mxu0
  %v598 = vadd.f32 0.0, %v597
  %v599 = vpop.f32.mrb[0].mxu0
  %600 = vmatprep.mubr.bf16.mxu0 0
  %601 = vmatmul.mubr.bf16.gmra.mrb[0].mxu0 %v411
  %v602 = vpop.f32.mrb[0].mxu0
  %v603 = vadd.f32 0.0, %v602
  %v604 = vpop.f32.mrb[0].mxu0
  %v605 = vpop.f32.mrb[0].mxu0
  %v606 = vadd.f32 0.0, %v605
  %v607 = vpop.f32.mrb[0].mxu0
  %608 = vmatprep.mubr.bf16.mxu0 0
  %609 = vmatmul.mubr.bf16.gmra.mrb[0].mxu0 %v412
  %v610 = vpop.f32.mrb[0].mxu0
  %v611 = vadd.f32 0.0, %v610
  %v612 = vpop.f32.mrb[0].mxu0
  %v613 = vpop.f32.mrb[0].mxu0
  %v614 = vadd.f32 0.0, %v613
  %v615 = vpop.f32.mrb[0].mxu0
  %616 = vmatprep.mubr.bf16.mxu0 0
  %617 = vmatmul.mubr.bf16.gmra.mrb[0].mxu0 %v413
  %v618 = vpop.f32.mrb[0].mxu0
  %v619 = vadd.f32 0.0, %v618
  %v620 = vpop.f32.mrb[0].mxu0
  %v621 = vpop.f32.mrb[0].mxu0
  %v622 = vadd.f32 0.0, %v621
  %v623 = vpop.f32.mrb[0].mxu0
  %624 = vmatprep.mubr.bf16.mxu0 0
  %625 = vmatmul.mubr.bf16.gmra.mrb[0].mxu0 %v414
  %v626 = vpop.f32.mrb[0].mxu0
  %v627 = vadd.f32 0.0, %v626
  %v628 = vpop.f32.mrb[0].mxu0
  %v629 = vpop.f32.mrb[0].mxu0
  %v630 = vadd.f32 0.0, %v629
  %v631 = vpop.f32.mrb[0].mxu0
  %632 = vmatprep.mubr.bf16.mxu0 0
  %633 = vmatmul.mubr.bf16.gmra.mrb[0].mxu0 %v415
  %v634 = vpop.f32.mrb[0].mxu0
  %v635 = vadd.f32 0.0, %v634
  %v636 = vpop.f32.mrb[0].mxu0
  %v637 = vpop.f32.mrb[0].mxu0
  %v638 = vadd.f32 0.0, %v637
  %v639 = vpop.f32.mrb[0].mxu0
  %640 = vdwg.mxu0
  %v641 = vmax.f32 %v515, 0.0
  %v642 = vmax.f32 %v518, 0.0
  %v643 = vmax.f32 %v523, 0.0
  %v644 = vmax.f32 %v526, 0.0
  %v645 = vmax.f32 %v531, 0.0
  %v646 = vmax.f32 %v534, 0.0
  %v647 = vmax.f32 %v539, 0.0
  %v648 = vmax.f32 %v542, 0.0
  %v649 = vmax.f32 %v547, 0.0
  %v650 = vmax.f32 %v550, 0.0
  %v651 = vmax.f32 %v555, 0.0
  %v652 = vmax.f32 %v558, 0.0
  %v653 = vmax.f32 %v563, 0.0
  %v654 = vmax.f32 %v566, 0.0
  %v655 = vmax.f32 %v571, 0.0
  %v656 = vmax.f32 %v574, 0.0
  %v657 = vmax.f32 %v579, 0.0
  %v658 = vmax.f32 %v582, 0.0
  %v659 = vmax.f32 %v587, 0.0
  %v660 = vmax.f32 %v590, 0.0
  %v661 = vmax.f32 %v595, 0.0
  %v662 = vmax.f32 %v598, 0.0
  %v663 = vmax.f32 %v603, 0.0
  %v664 = vmax.f32 %v606, 0.0
  %v665 = vmax.f32 %v611, 0.0
  %v666 = vmax.f32 %v614, 0.0
  %v667 = vmax.f32 %v619, 0.0
  %v668 = vmax.f32 %v622, 0.0
  %v669 = vmax.f32 %v627, 0.0
  %v670 = vmax.f32 %v630, 0.0
  %v671 = vmax.f32 %v635, 0.0
  %v672 = vmax.f32 %v638, 0.0
  %v673 = vpack.c.bf16 %v642, %v641
  %v674 = vpack.c.bf16 %v644, %v643
  %v675 = vpack.c.bf16 %v646, %v645
  %v676 = vpack.c.bf16 %v648, %v647
  %v677 = vpack.c.bf16 %v650, %v649
  %v678 = vpack.c.bf16 %v652, %v651
  %v679 = vpack.c.bf16 %v654, %v653
  %v680 = vpack.c.bf16 %v656, %v655
  %v681 = vpack.c.bf16 %v658, %v657
  %v682 = vpack.c.bf16 %v660, %v659
  %v683 = vpack.c.bf16 %v662, %v661
  %v684 = vpack.c.bf16 %v664, %v663
  %v685 = vpack.c.bf16 %v666, %v665
  %v686 = vpack.c.bf16 %v668, %v667
  %v687 = vpack.c.bf16 %v670, %v669
  %v688 = vpack.c.bf16 %v672, %v671
  %v705 = vunpack.c.l.b16 %v673
  %v706 = vunpack.c.h.b16 %v673
  %v707 = vunpack.c.l.b16 %v674
  %v708 = vunpack.c.h.b16 %v674
  %v709 = vunpack.c.l.b16 %v675
  %v710 = vunpack.c.h.b16 %v675
  %v711 = vunpack.c.l.b16 %v676
  %v712 = vunpack.c.h.b16 %v676
  %v713 = vunpack.c.l.b16 %v677
  %v714 = vunpack.c.h.b16 %v677
  %v715 = vunpack.c.l.b16 %v678
  %v716 = vunpack.c.h.b16 %v678
  %v717 = vunpack.c.l.b16 %v679
  %v718 = vunpack.c.h.b16 %v679
  %v719 = vunpack.c.l.b16 %v680
  %v720 = vunpack.c.h.b16 %v680
  %v721 = vunpack.c.l.b16 %v681
  %v722 = vunpack.c.h.b16 %v681
  %v723 = vunpack.c.l.b16 %v682
  %v724 = vunpack.c.h.b16 %v682
  %v725 = vunpack.c.l.b16 %v683
  %v726 = vunpack.c.h.b16 %v683
  %v727 = vunpack.c.l.b16 %v684
  %v728 = vunpack.c.h.b16 %v684
  %v729 = vunpack.c.l.b16 %v685
  %v730 = vunpack.c.h.b16 %v685
  %v731 = vunpack.c.l.b16 %v686
  %v732 = vunpack.c.h.b16 %v686
  %v733 = vunpack.c.l.b16 %v687
  %v734 = vunpack.c.h.b16 %v687
  %v735 = vunpack.c.l.b16 %v688
  %v736 = vunpack.c.h.b16 %v688
  %v737 = vpack.c.b16 %v705, %v705
  %v738 = vpack.c.b16 %v706, %v706
  %v739 = vpack.c.b16 %v707, %v707
  %v740 = vpack.c.b16 %v708, %v708
  %v741 = vpack.c.b16 %v709, %v709
  %v742 = vpack.c.b16 %v710, %v710
  %v743 = vpack.c.b16 %v711, %v711
  %v744 = vpack.c.b16 %v712, %v712
  %v745 = vpack.c.b16 %v713, %v713
  %v746 = vpack.c.b16 %v714, %v714
  %v747 = vpack.c.b16 %v715, %v715
  %v748 = vpack.c.b16 %v716, %v716
  %v749 = vpack.c.b16 %v717, %v717
  %v750 = vpack.c.b16 %v718, %v718
  %v751 = vpack.c.b16 %v719, %v719
  %v752 = vpack.c.b16 %v720, %v720
  %v753 = vpack.c.b16 %v721, %v721
  %v754 = vpack.c.b16 %v722, %v722
  %v755 = vpack.c.b16 %v723, %v723
  %v756 = vpack.c.b16 %v724, %v724
  %v757 = vpack.c.b16 %v725, %v725
  %v758 = vpack.c.b16 %v726, %v726
  %v759 = vpack.c.b16 %v727, %v727
  %v760 = vpack.c.b16 %v728, %v728
  %v761 = vpack.c.b16 %v729, %v729
  %v762 = vpack.c.b16 %v730, %v730
  %v763 = vpack.c.b16 %v731, %v731
  %v764 = vpack.c.b16 %v732, %v732
  %v765 = vpack.c.b16 %v733, %v733
  %v766 = vpack.c.b16 %v734, %v734
  %v767 = vpack.c.b16 %v735, %v735
  %v768 = vpack.c.b16 %v736, %v736
  %801 = vst [vmem:[%s3] sm:$0xf] %v737
  %802 = vst [vmem:[%s3 + $0x4] sm:$0xf] %v738
  %803 = vst [vmem:[%s3 + $0x8] sm:$0xf] %v739
  %804 = vst [vmem:[%s3 + $0xc] sm:$0xf] %v740
  %805 = vst [vmem:[%s3 + $0x10] sm:$0xf] %v741
  %806 = vst [vmem:[%s3 + $0x14] sm:$0xf] %v742
  %807 = vst [vmem:[%s3 + $0x18] sm:$0xf] %v743
  %808 = vst [vmem:[%s3 + $0x1c] sm:$0xf] %v744
  %809 = vst [vmem:[%s3 + $0x20] sm:$0xf] %v745
  %810 = vst [vmem:[%s3 + $0x24] sm:$0xf] %v746
  %811 = vst [vmem:[%s3 + $0x28] sm:$0xf] %v747
  %812 = vst [vmem:[%s3 + $0x2c] sm:$0xf] %v748
  %813 = vst [vmem:[%s3 + $0x30] sm:$0xf] %v749
  %814 = vst [vmem:[%s3 + $0x34] sm:$0xf] %v750
  %815 = vst [vmem:[%s3 + $0x38] sm:$0xf] %v751
  %816 = vst [vmem:[%s3 + $0x3c] sm:$0xf] %v752
  %817 = vst [vmem:[%s3 + $0x40] sm:$0xf] %v753
  %818 = vst [vmem:[%s3 + $0x44] sm:$0xf] %v754
  %819 = vst [vmem:[%s3 + $0x48] sm:$0xf] %v755
  %820 = vst [vmem:[%s3 + $0x4c] sm:$0xf] %v756
  %821 = vst [vmem:[%s3 + $0x50] sm:$0xf] %v757
  %822 = vst [vmem:[%s3 + $0x54] sm:$0xf] %v758
  %823 = vst [vmem:[%s3 + $0x58] sm:$0xf] %v759
  %824 = vst [vmem:[%s3 + $0x5c] sm:$0xf] %v760
  %825 = vst [vmem:[%s3 + $0x60] sm:$0xf] %v761
  %826 = vst [vmem:[%s3 + $0x64] sm:$0xf] %v762
  %827 = vst [vmem:[%s3 + $0x68] sm:$0xf] %v763
  %828 = vst [vmem:[%s3 + $0x6c] sm:$0xf] %v764
  %829 = vst [vmem:[%s3 + $0x70] sm:$0xf] %v765
  %830 = vst [vmem:[%s3 + $0x74] sm:$0xf] %v766
  %831 = vst [vmem:[%s3 + $0x78] sm:$0xf] %v767
  %832 = vst [vmem:[%s3 + $0x7c] sm:$0xf] %v768
  // Predicated region
  $region14: #{gmdn_transition_forward.4} parent=0 // pred_check
    _
  $region15: #{gmdn_transition_forward.4} parent=0 // pred_check_branch
    %834 = sbr.rel (0) target = $region17
  $region16: #{gmdn_transition_forward.4} parent=0 // pred_region
    _
  $region17: #{gmdn_transition_forward.4} parent=0 // pred_fallthru
    _
  // Predicated region
  $region18: #{gmdn_transition_forward.4} parent=0 // pred_check
    _
  $region19: #{gmdn_transition_forward.4} parent=0 // pred_check_branch
    %836 = sbr.rel (0) target = $region21
  $region20: #{gmdn_transition_forward.4} parent=0 // pred_region
    _
  $region21: #{gmdn_transition_forward.4} parent=0 // pred_fallthru
    _

// kernel: gmdn_transition_forward.5
$region0: #{gmdn_transition_forward.5}
  #allocation0 [shape = 'u32[]', space=smem, size = 0x4, offset = 0x4, fixed_abs, tag = 'smem constant byte address 0x4 - core index']
  #allocation1 [shape = 'u32[144,128]{1,0:T(1,128)}', space=vmem, size = 0x12000, scoped, tag = 'internal scratch']
  #allocation2 [shape = 'f32[256,128]{1,0:T(8,128)}', space=vmem, size = 0x20000, scoped, tag = 'scratch operand']
  %s0 = inlined_call_operand.vmem [shape: bf16[256,256], index: 0, kind: input, shape index: {}]
  %s1 = inlined_call_operand.vmem [shape: bf16[256,128], index: 1, kind: input, shape index: {}]
  %s2 = inlined_call_operand.vmem [shape: bf16[128,128], index: 2, kind: input, shape index: {}]
  %s3 = inlined_call_operand.vmem [shape: bf16[128,128], index: 3, kind: input, shape index: {}]
  %s4 = inlined_call_operand.vmem [shape: bf16[256,128], index: 4, kind: output, shape index: {}]
  %s5 = sld [smem:[#allocation0]]
  $region34: #{gmdn_transition_forward.5} parent=0
    _
  %s7 = ssub.s32 1, %s5
  %s8 = scalar_select 0, %s7, %s5
  // Predicated region
  $region2: #{gmdn_transition_forward.5} parent=0 // pred_check
    _
  $region3: #{gmdn_transition_forward.5} parent=0 // pred_check_branch
    %10 = sbr.rel (0) target = $region5
  $region4: #{gmdn_transition_forward.5} parent=0 // pred_region
    _
  $region5: #{gmdn_transition_forward.5} parent=0 // pred_fallthru
    _
  // Predicated region
  $region6: #{gmdn_transition_forward.5} parent=0 // pred_check
    _
  $region7: #{gmdn_transition_forward.5} parent=0 // pred_check_branch
    %12 = sbr.rel (0) target = $region9
  $region8: #{gmdn_transition_forward.5} parent=0 // pred_region
    _
  $region9: #{gmdn_transition_forward.5} parent=0 // pred_fallthru
    _
  // Predicated region
  $region10: #{gmdn_transition_forward.5} parent=0 // pred_check
    _
  $region11: #{gmdn_transition_forward.5} parent=0 // pred_check_branch
    %14 = sbr.rel (0) target = $region13
  $region12: #{gmdn_transition_forward.5} parent=0 // pred_region
    _
  $region13: #{gmdn_transition_forward.5} parent=0 // pred_fallthru
    _
  // Predicated region
  $region14: #{gmdn_transition_forward.5} parent=0 // pred_check
    _
  $region15: #{gmdn_transition_forward.5} parent=0 // pred_check_branch
    %16 = sbr.rel (0) target = $region17
  $region16: #{gmdn_transition_forward.5} parent=0 // pred_region
    _
  $region17: #{gmdn_transition_forward.5} parent=0 // pred_fallthru
    _
  %p18 = scmp.eq.s32.totalorder 0, 0
  // Predicated region
  $region18: #{gmdn_transition_forward.5} parent=0 // pred_check
    %p19 = pneg %p18
  $region19: #{gmdn_transition_forward.5} parent=0 // pred_check_branch
    %21 = sbr.rel (%p19) target = $region21
  $region20: #{gmdn_transition_forward.5} parent=0 // pred_region
    %22 = vst [vmem:[#allocation2] sm:$0xff] 0.0
    %23 = vst [vmem:[#allocation2 + $0x8] sm:$0xff] 0.0
    %24 = vst [vmem:[#allocation2 + $0x10] sm:$0xff] 0.0
    %25 = vst [vmem:[#allocation2 + $0x18] sm:$0xff] 0.0
    %26 = vst [vmem:[#allocation2 + $0x20] sm:$0xff] 0.0
    %27 = vst [vmem:[#allocation2 + $0x28] sm:$0xff] 0.0
    %28 = vst [vmem:[#allocation2 + $0x30] sm:$0xff] 0.0
    %29 = vst [vmem:[#allocation2 + $0x38] sm:$0xff] 0.0
    %30 = vst [vmem:[#allocation2 + $0x40] sm:$0xff] 0.0
    %31 = vst [vmem:[#allocation2 + $0x48] sm:$0xff] 0.0
    %32 = vst [vmem:[#allocation2 + $0x50] sm:$0xff] 0.0
    %33 = vst [vmem:[#allocation2 + $0x58] sm:$0xff] 0.0
    %34 = vst [vmem:[#allocation2 + $0x60] sm:$0xff] 0.0
    %35 = vst [vmem:[#allocation2 + $0x68] sm:$0xff] 0.0
    %36 = vst [vmem:[#allocation2 + $0x70] sm:$0xff] 0.0
    %37 = vst [vmem:[#allocation2 + $0x78] sm:$0xff] 0.0
    %38 = vst [vmem:[#allocation2 + $0x80] sm:$0xff] 0.0
    %39 = vst [vmem:[#allocation2 + $0x88] sm:$0xff] 0.0
    %40 = vst [vmem:[#allocation2 + $0x90] sm:$0xff] 0.0
    %41 = vst [vmem:[#allocation2 + $0x98] sm:$0xff] 0.0
    %42 = vst [vmem:[#allocation2 + $0xa0] sm:$0xff] 0.0
    %43 = vst [vmem:[#allocation2 + $0xa8] sm:$0xff] 0.0
    %44 = vst [vmem:[#allocation2 + $0xb0] sm:$0xff] 0.0
    %45 = vst [vmem:[#allocation2 + $0xb8] sm:$0xff] 0.0
    %46 = vst [vmem:[#allocation2 + $0xc0] sm:$0xff] 0.0
    %47 = vst [vmem:[#allocation2 + $0xc8] sm:$0xff] 0.0
    %48 = vst [vmem:[#allocation2 + $0xd0] sm:$0xff] 0.0
    %49 = vst [vmem:[#allocation2 + $0xd8] sm:$0xff] 0.0
    %50 = vst [vmem:[#allocation2 + $0xe0] sm:$0xff] 0.0
    %51 = vst [vmem:[#allocation2 + $0xe8] sm:$0xff] 0.0
    %52 = vst [vmem:[#allocation2 + $0xf0] sm:$0xff] 0.0
    %53 = vst [vmem:[#allocation2 + $0xf8] sm:$0xff] 0.0
  $region21: #{gmdn_transition_forward.5} parent=0 // pred_fallthru
    _
  %v54 = vld [vmem:[#allocation2] sm:$0xff]
  %v55 = vld [vmem:[#allocation2 + $0x8] sm:$0xff]
  %v56 = vld [vmem:[#allocation2 + $0x10] sm:$0xff]
  %v57 = vld [vmem:[#allocation2 + $0x18] sm:$0xff]
  %v58 = vld [vmem:[#allocation2 + $0x20] sm:$0xff]
  %v59 = vld [vmem:[#allocation2 + $0x28] sm:$0xff]
  %v60 = vld [vmem:[#allocation2 + $0x30] sm:$0xff]
  %v61 = vld [vmem:[#allocation2 + $0x38] sm:$0xff]
  %v62 = vld [vmem:[#allocation2 + $0x40] sm:$0xff]
  %v63 = vld [vmem:[#allocation2 + $0x48] sm:$0xff]
  %v64 = vld [vmem:[#allocation2 + $0x50] sm:$0xff]
  %v65 = vld [vmem:[#allocation2 + $0x58] sm:$0xff]
  %v66 = vld [vmem:[#allocation2 + $0x60] sm:$0xff]
  %v67 = vld [vmem:[#allocation2 + $0x68] sm:$0xff]
  %v68 = vld [vmem:[#allocation2 + $0x70] sm:$0xff]
  %v69 = vld [vmem:[#allocation2 + $0x78] sm:$0xff]
  %v70 = vld [vmem:[#allocation2 + $0x80] sm:$0xff]
  %v71 = vld [vmem:[#allocation2 + $0x88] sm:$0xff]
  %v72 = vld [vmem:[#allocation2 + $0x90] sm:$0xff]
  %v73 = vld [vmem:[#allocation2 + $0x98] sm:$0xff]
  %v74 = vld [vmem:[#allocation2 + $0xa0] sm:$0xff]
  %v75 = vld [vmem:[#allocation2 + $0xa8] sm:$0xff]
  %v76 = vld [vmem:[#allocation2 + $0xb0] sm:$0xff]
  %v77 = vld [vmem:[#allocation2 + $0xb8] sm:$0xff]
  %v78 = vld [vmem:[#allocation2 + $0xc0] sm:$0xff]
  %v79 = vld [vmem:[#allocation2 + $0xc8] sm:$0xff]
  %v80 = vld [vmem:[#allocation2 + $0xd0] sm:$0xff]
  %v81 = vld [vmem:[#allocation2 + $0xd8] sm:$0xff]
  %v82 = vld [vmem:[#allocation2 + $0xe0] sm:$0xff]
  %v83 = vld [vmem:[#allocation2 + $0xe8] sm:$0xff]
  %v84 = vld [vmem:[#allocation2 + $0xf0] sm:$0xff]
  %v85 = vld [vmem:[#allocation2 + $0xf8] sm:$0xff]
  %v86 = vld [vmem:[%s0] sm:$0xff]
  %v87 = vld [vmem:[%s0 + $0x8] sm:$0xff]
  %v88 = vld [vmem:[%s0 + $0x10] sm:$0xff]
  %v89 = vld [vmem:[%s0 + $0x18] sm:$0xff]
  %v90 = vld [vmem:[%s0 + $0x20] sm:$0xff]
  %v91 = vld [vmem:[%s0 + $0x28] sm:$0xff]
  %v92 = vld [vmem:[%s0 + $0x30] sm:$0xff]
  %v93 = vld [vmem:[%s0 + $0x38] sm:$0xff]
  %v94 = vld [vmem:[%s0 + $0x40] sm:$0xff]
  %v95 = vld [vmem:[%s0 + $0x48] sm:$0xff]
  %v96 = vld [vmem:[%s0 + $0x50] sm:$0xff]
  %v97 = vld [vmem:[%s0 + $0x58] sm:$0xff]
  %v98 = vld [vmem:[%s0 + $0x60] sm:$0xff]
  %v99 = vld [vmem:[%s0 + $0x68] sm:$0xff]
  %v100 = vld [vmem:[%s0 + $0x70] sm:$0xff]
  %v101 = vld [vmem:[%s0 + $0x78] sm:$0xff]
  %v102 = vld [vmem:[%s0 + $0x80] sm:$0xff]
  %v103 = vld [vmem:[%s0 + $0x88] sm:$0xff]
  %v104 = vld [vmem:[%s0 + $0x90] sm:$0xff]
  %v105 = vld [vmem:[%s0 + $0x98] sm:$0xff]
  %v106 = vld [vmem:[%s0 + $0xa0] sm:$0xff]
  %v107 = vld [vmem:[%s0 + $0xa8] sm:$0xff]
  %v108 = vld [vmem:[%s0 + $0xb0] sm:$0xff]
  %v109 = vld [vmem:[%s0 + $0xb8] sm:$0xff]
  %v110 = vld [vmem:[%s0 + $0xc0] sm:$0xff]
  %v111 = vld [vmem:[%s0 + $0xc8] sm:$0xff]
  %v112 = vld [vmem:[%s0 + $0xd0] sm:$0xff]
  %v113 = vld [vmem:[%s0 + $0xd8] sm:$0xff]
  %v114 = vld [vmem:[%s0 + $0xe0] sm:$0xff]
  %v115 = vld [vmem:[%s0 + $0xe8] sm:$0xff]
  %v116 = vld [vmem:[%s0 + $0xf0] sm:$0xff]
  %v117 = vld [vmem:[%s0 + $0xf8] sm:$0xff]
  %v118 = vld [vmem:[%s1] sm:$0xf]
  %v119 = vld [vmem:[%s1 + $0x4] sm:$0xf]
  %v120 = vld [vmem:[%s1 + $0x8] sm:$0xf]
  %v121 = vld [vmem:[%s1 + $0xc] sm:$0xf]
  %v122 = vld [vmem:[%s1 + $0x10] sm:$0xf]
  %v123 = vld [vmem:[%s1 + $0x14] sm:$0xf]
  %v124 = vld [vmem:[%s1 + $0x18] sm:$0xf]
  %v125 = vld [vmem:[%s1 + $0x1c] sm:$0xf]
  %v126 = vld [vmem:[%s1 + $0x20] sm:$0xf]
  %v127 = vld [vmem:[%s1 + $0x24] sm:$0xf]
  %v128 = vld [vmem:[%s1 + $0x28] sm:$0xf]
  %v129 = vld [vmem:[%s1 + $0x2c] sm:$0xf]
  %v130 = vld [vmem:[%s1 + $0x30] sm:$0xf]
  %v131 = vld [vmem:[%s1 + $0x34] sm:$0xf]
  %v132 = vld [vmem:[%s1 + $0x38] sm:$0xf]
  %v133 = vld [vmem:[%s1 + $0x3c] sm:$0xf]
  %v134 = vld [vmem:[%s1 + $0x40] sm:$0xf]
  %v135 = vld [vmem:[%s1 + $0x44] sm:$0xf]
  %v136 = vld [vmem:[%s1 + $0x48] sm:$0xf]
  %v137 = vld [vmem:[%s1 + $0x4c] sm:$0xf]
  %v138 = vld [vmem:[%s1 + $0x50] sm:$0xf]
  %v139 = vld [vmem:[%s1 + $0x54] sm:$0xf]
  %v140 = vld [vmem:[%s1 + $0x58] sm:$0xf]
  %v141 = vld [vmem:[%s1 + $0x5c] sm:$0xf]
  %v142 = vld [vmem:[%s1 + $0x60] sm:$0xf]
  %v143 = vld [vmem:[%s1 + $0x64] sm:$0xf]
  %v144 = vld [vmem:[%s1 + $0x68] sm:$0xf]
  %v145 = vld [vmem:[%s1 + $0x6c] sm:$0xf]
  %v146 = vld [vmem:[%s1 + $0x70] sm:$0xf]
  %v147 = vld [vmem:[%s1 + $0x74] sm:$0xf]
  %v148 = vld [vmem:[%s1 + $0x78] sm:$0xf]
  %v149 = vld [vmem:[%s1 + $0x7c] sm:$0xf]
  %v182 = vunpack.c.l.b16 %v86
  %v183 = vunpack.c.h.b16 %v86
  %v184 = vunpack.c.l.b16 %v87
  %v185 = vunpack.c.h.b16 %v87
  %v186 = vunpack.c.l.b16 %v88
  %v187 = vunpack.c.h.b16 %v88
  %v188 = vunpack.c.l.b16 %v89
  %v189 = vunpack.c.h.b16 %v89
  %v190 = vunpack.c.l.b16 %v90
  %v191 = vunpack.c.h.b16 %v90
  %v192 = vunpack.c.l.b16 %v91
  %v193 = vunpack.c.h.b16 %v91
  %v194 = vunpack.c.l.b16 %v92
  %v195 = vunpack.c.h.b16 %v92
  %v196 = vunpack.c.l.b16 %v93
  %v197 = vunpack.c.h.b16 %v93
  %v198 = vunpack.c.l.b16 %v94
  %v199 = vunpack.c.h.b16 %v94
  %v200 = vunpack.c.l.b16 %v95
  %v201 = vunpack.c.h.b16 %v95
  %v202 = vunpack.c.l.b16 %v96
  %v203 = vunpack.c.h.b16 %v96
  %v204 = vunpack.c.l.b16 %v97
  %v205 = vunpack.c.h.b16 %v97
  %v206 = vunpack.c.l.b16 %v98
  %v207 = vunpack.c.h.b16 %v98
  %v208 = vunpack.c.l.b16 %v99
  %v209 = vunpack.c.h.b16 %v99
  %v210 = vunpack.c.l.b16 %v100
  %v211 = vunpack.c.h.b16 %v100
  %v212 = vunpack.c.l.b16 %v101
  %v213 = vunpack.c.h.b16 %v101
  %v214 = vunpack.c.l.b16 %v102
  %v215 = vunpack.c.h.b16 %v102
  %v216 = vunpack.c.l.b16 %v103
  %v217 = vunpack.c.h.b16 %v103
  %v218 = vunpack.c.l.b16 %v104
  %v219 = vunpack.c.h.b16 %v104
  %v220 = vunpack.c.l.b16 %v105
  %v221 = vunpack.c.h.b16 %v105
  %v222 = vunpack.c.l.b16 %v106
  %v223 = vunpack.c.h.b16 %v106
  %v224 = vunpack.c.l.b16 %v107
  %v225 = vunpack.c.h.b16 %v107
  %v226 = vunpack.c.l.b16 %v108
  %v227 = vunpack.c.h.b16 %v108
  %v228 = vunpack.c.l.b16 %v109
  %v229 = vunpack.c.h.b16 %v109
  %v230 = vunpack.c.l.b16 %v110
  %v231 = vunpack.c.h.b16 %v110
  %v232 = vunpack.c.l.b16 %v111
  %v233 = vunpack.c.h.b16 %v111
  %v234 = vunpack.c.l.b16 %v112
  %v235 = vunpack.c.h.b16 %v112
  %v236 = vunpack.c.l.b16 %v113
  %v237 = vunpack.c.h.b16 %v113
  %v238 = vunpack.c.l.b16 %v114
  %v239 = vunpack.c.h.b16 %v114
  %v240 = vunpack.c.l.b16 %v115
  %v241 = vunpack.c.h.b16 %v115
  %v242 = vunpack.c.l.b16 %v116
  %v243 = vunpack.c.h.b16 %v116
  %v244 = vunpack.c.l.b16 %v117
  %v245 = vunpack.c.h.b16 %v117
  %v246 = vpack.c.b16 %v184, %v182
  %v247 = vpack.c.b16 %v185, %v183
  %v248 = vpack.c.b16 %v188, %v186
  %v249 = vpack.c.b16 %v189, %v187
  %v250 = vpack.c.b16 %v192, %v190
  %v251 = vpack.c.b16 %v193, %v191
  %v252 = vpack.c.b16 %v196, %v194
  %v253 = vpack.c.b16 %v197, %v195
  %v254 = vpack.c.b16 %v200, %v198
  %v255 = vpack.c.b16 %v201, %v199
  %v256 = vpack.c.b16 %v204, %v202
  %v257 = vpack.c.b16 %v205, %v203
  %v258 = vpack.c.b16 %v208, %v206
  %v259 = vpack.c.b16 %v209, %v207
  %v260 = vpack.c.b16 %v212, %v210
  %v261 = vpack.c.b16 %v213, %v211
  %v262 = vpack.c.b16 %v216, %v214
  %v263 = vpack.c.b16 %v217, %v215
  %v264 = vpack.c.b16 %v220, %v218
  %v265 = vpack.c.b16 %v221, %v219
  %v266 = vpack.c.b16 %v224, %v222
  %v267 = vpack.c.b16 %v225, %v223
  %v268 = vpack.c.b16 %v228, %v226
  %v269 = vpack.c.b16 %v229, %v227
  %v270 = vpack.c.b16 %v232, %v230
  %v271 = vpack.c.b16 %v233, %v231
  %v272 = vpack.c.b16 %v236, %v234
  %v273 = vpack.c.b16 %v237, %v235
  %v274 = vpack.c.b16 %v240, %v238
  %v275 = vpack.c.b16 %v241, %v239
  %v276 = vpack.c.b16 %v244, %v242
  %v277 = vpack.c.b16 %v245, %v243
  %v342 = vunpack.c.l.b16 %v118
  %v343 = vunpack.c.l.b16 %v119
  %v344 = vunpack.c.l.b16 %v120
  %v345 = vunpack.c.l.b16 %v121
  %v346 = vunpack.c.l.b16 %v122
  %v347 = vunpack.c.l.b16 %v123
  %v348 = vunpack.c.l.b16 %v124
  %v349 = vunpack.c.l.b16 %v125
  %v350 = vunpack.c.l.b16 %v126
  %v351 = vunpack.c.l.b16 %v127
  %v352 = vunpack.c.l.b16 %v128
  %v353 = vunpack.c.l.b16 %v129
  %v354 = vunpack.c.l.b16 %v130
  %v355 = vunpack.c.l.b16 %v131
  %v356 = vunpack.c.l.b16 %v132
  %v357 = vunpack.c.l.b16 %v133
  %v358 = vunpack.c.l.b16 %v134
  %v359 = vunpack.c.l.b16 %v135
  %v360 = vunpack.c.l.b16 %v136
  %v361 = vunpack.c.l.b16 %v137
  %v362 = vunpack.c.l.b16 %v138
  %v363 = vunpack.c.l.b16 %v139
  %v364 = vunpack.c.l.b16 %v140
  %v365 = vunpack.c.l.b16 %v141
  %v366 = vunpack.c.l.b16 %v142
  %v367 = vunpack.c.l.b16 %v143
  %v368 = vunpack.c.l.b16 %v144
  %v369 = vunpack.c.l.b16 %v145
  %v370 = vunpack.c.l.b16 %v146
  %v371 = vunpack.c.l.b16 %v147
  %v372 = vunpack.c.l.b16 %v148
  %v373 = vunpack.c.l.b16 %v149
  %v374 = vpack.c.b16 %v343, %v342
  %v375 = vpack.c.b16 %v345, %v344
  %v376 = vpack.c.b16 %v347, %v346
  %v377 = vpack.c.b16 %v349, %v348
  %v378 = vpack.c.b16 %v351, %v350
  %v379 = vpack.c.b16 %v353, %v352
  %v380 = vpack.c.b16 %v355, %v354
  %v381 = vpack.c.b16 %v357, %v356
  %v382 = vpack.c.b16 %v359, %v358
  %v383 = vpack.c.b16 %v361, %v360
  %v384 = vpack.c.b16 %v363, %v362
  %v385 = vpack.c.b16 %v365, %v364
  %v386 = vpack.c.b16 %v367, %v366
  %v387 = vpack.c.b16 %v369, %v368
  %v388 = vpack.c.b16 %v371, %v370
  %v389 = vpack.c.b16 %v373, %v372
  %406 = vmatprep.subr.bf16.mxu0 0
  %407 = vmatpush1.bf16.msra.mxu0 %v374
  %408 = vmatprep.subr.bf16.mxu0 0
  %409 = vmatpush1.bf16.msra.mxu0 %v375
  %410 = vmatprep.subr.bf16.mxu0 0
  %411 = vmatpush1.bf16.msra.mxu0 %v376
  %412 = vmatprep.subr.bf16.mxu0 0
  %413 = vmatpush1.bf16.msra.mxu0 %v377
  %414 = vmatprep.subr.bf16.mxu0 0
  %415 = vmatpush1.bf16.msra.mxu0 %v378
  %416 = vmatprep.subr.bf16.mxu0 0
  %417 = vmatpush1.bf16.msra.mxu0 %v379
  %418 = vmatprep.subr.bf16.mxu0 0
  %419 = vmatpush1.bf16.msra.mxu0 %v380
  %420 = vmatprep.subr.bf16.mxu0 0
  %421 = vmatpush1.bf16.msra.mxu0 %v381
  %422 = vmatprep.subr.bf16.mxu0 0
  %423 = vmatpush1.bf16.msra.mxu0 %v382
  %424 = vmatprep.subr.bf16.mxu0 0
  %425 = vmatpush1.bf16.msra.mxu0 %v383
  %426 = vmatprep.subr.bf16.mxu0 0
  %427 = vmatpush1.bf16.msra.mxu0 %v384
  %428 = vmatprep.subr.bf16.mxu0 0
  %429 = vmatpush1.bf16.msra.mxu0 %v385
  %430 = vmatprep.subr.bf16.mxu0 0
  %431 = vmatpush1.bf16.msra.mxu0 %v386
  %432 = vmatprep.subr.bf16.mxu0 0
  %433 = vmatpush1.bf16.msra.mxu0 %v387
  %434 = vmatprep.subr.bf16.mxu0 0
  %435 = vmatpush1.bf16.msra.mxu0 %v388
  %436 = vmatprep.subr.bf16.mxu0 0
  %437 = vmatpush1.bf16.msra.mxu0 %v389
  %438 = vmatprep.mubr.bf16.mxu0 %v247
  %439 = vmatmul.mubr.bf16.gmra.mrb[0].mxu0 %v246
  %v440 = vpop.f32.mrb[0].mxu0
  %v441 = vadd.f32 0.0, %v440
  %v442 = vpop.f32.mrb[0].mxu0
  %v443 = vpop.f32.mrb[0].mxu0
  %v444 = vadd.f32 0.0, %v443
  %v445 = vpop.f32.mrb[0].mxu0
  %446 = vmatprep.mubr.bf16.mxu0 %v249
  %447 = vmatmul.mubr.bf16.gmra.mrb[0].mxu0 %v248
  %v448 = vpop.f32.mrb[0].mxu0
  %v449 = vadd.f32 0.0, %v448
  %v450 = vpop.f32.mrb[0].mxu0
  %v451 = vpop.f32.mrb[0].mxu0
  %v452 = vadd.f32 0.0, %v451
  %v453 = vpop.f32.mrb[0].mxu0
  %454 = vmatprep.mubr.bf16.mxu0 %v251
  %455 = vmatmul.mubr.bf16.gmra.mrb[0].mxu0 %v250
  %v456 = vpop.f32.mrb[0].mxu0
  %v457 = vadd.f32 0.0, %v456
  %v458 = vpop.f32.mrb[0].mxu0
  %v459 = vpop.f32.mrb[0].mxu0
  %v460 = vadd.f32 0.0, %v459
  %v461 = vpop.f32.mrb[0].mxu0
  %462 = vmatprep.mubr.bf16.mxu0 %v253
  %463 = vmatmul.mubr.bf16.gmra.mrb[0].mxu0 %v252
  %v464 = vpop.f32.mrb[0].mxu0
  %v465 = vadd.f32 0.0, %v464
  %v466 = vpop.f32.mrb[0].mxu0
  %v467 = vpop.f32.mrb[0].mxu0
  %v468 = vadd.f32 0.0, %v467
  %v469 = vpop.f32.mrb[0].mxu0
  %470 = vmatprep.mubr.bf16.mxu0 %v255
  %471 = vmatmul.mubr.bf16.gmra.mrb[0].mxu0 %v254
  %v472 = vpop.f32.mrb[0].mxu0
  %v473 = vadd.f32 0.0, %v472
  %v474 = vpop.f32.mrb[0].mxu0
  %v475 = vpop.f32.mrb[0].mxu0
  %v476 = vadd.f32 0.0, %v475
  %v477 = vpop.f32.mrb[0].mxu0
  %478 = vmatprep.mubr.bf16.mxu0 %v257
  %479 = vmatmul.mubr.bf16.gmra.mrb[0].mxu0 %v256
  %v480 = vpop.f32.mrb[0].mxu0
  %v481 = vadd.f32 0.0, %v480
  %v482 = vpop.f32.mrb[0].mxu0
  %v483 = vpop.f32.mrb[0].mxu0
  %v484 = vadd.f32 0.0, %v483
  %v485 = vpop.f32.mrb[0].mxu0
  %486 = vmatprep.mubr.bf16.mxu0 %v259
  %487 = vmatmul.mubr.bf16.gmra.mrb[0].mxu0 %v258
  %v488 = vpop.f32.mrb[0].mxu0
  %v489 = vadd.f32 0.0, %v488
  %v490 = vpop.f32.mrb[0].mxu0
  %v491 = vpop.f32.mrb[0].mxu0
  %v492 = vadd.f32 0.0, %v491
  %v493 = vpop.f32.mrb[0].mxu0
  %494 = vmatprep.mubr.bf16.mxu0 %v261
  %495 = vmatmul.mubr.bf16.gmra.mrb[0].mxu0 %v260
  %v496 = vpop.f32.mrb[0].mxu0
  %v497 = vadd.f32 0.0, %v496
  %v498 = vpop.f32.mrb[0].mxu0
  %v499 = vpop.f32.mrb[0].mxu0
  %v500 = vadd.f32 0.0, %v499
  %v501 = vpop.f32.mrb[0].mxu0
  %502 = vmatprep.mubr.bf16.mxu0 %v263
  %503 = vmatmul.mubr.bf16.gmra.mrb[0].mxu0 %v262
  %v504 = vpop.f32.mrb[0].mxu0
  %v505 = vadd.f32 0.0, %v504
  %v506 = vpop.f32.mrb[0].mxu0
  %v507 = vpop.f32.mrb[0].mxu0
  %v508 = vadd.f32 0.0, %v507
  %v509 = vpop.f32.mrb[0].mxu0
  %510 = vmatprep.mubr.bf16.mxu0 %v265
  %511 = vmatmul.mubr.bf16.gmra.mrb[0].mxu0 %v264
  %v512 = vpop.f32.mrb[0].mxu0
  %v513 = vadd.f32 0.0, %v512
  %v514 = vpop.f32.mrb[0].mxu0
  %v515 = vpop.f32.mrb[0].mxu0
  %v516 = vadd.f32 0.0, %v515
  %v517 = vpop.f32.mrb[0].mxu0
  %518 = vmatprep.mubr.bf16.mxu0 %v267
  %519 = vmatmul.mubr.bf16.gmra.mrb[0].mxu0 %v266
  %v520 = vpop.f32.mrb[0].mxu0
  %v521 = vadd.f32 0.0, %v520
  %v522 = vpop.f32.mrb[0].mxu0
  %v523 = vpop.f32.mrb[0].mxu0
  %v524 = vadd.f32 0.0, %v523
  %v525 = vpop.f32.mrb[0].mxu0
  %526 = vmatprep.mubr.bf16.mxu0 %v269
  %527 = vmatmul.mubr.bf16.gmra.mrb[0].mxu0 %v268
  %v528 = vpop.f32.mrb[0].mxu0
  %v529 = vadd.f32 0.0, %v528
  %v530 = vpop.f32.mrb[0].mxu0
  %v531 = vpop.f32.mrb[0].mxu0
  %v532 = vadd.f32 0.0, %v531
  %v533 = vpop.f32.mrb[0].mxu0
  %534 = vmatprep.mubr.bf16.mxu0 %v271
  %535 = vmatmul.mubr.bf16.gmra.mrb[0].mxu0 %v270
  %v536 = vpop.f32.mrb[0].mxu0
  %v537 = vadd.f32 0.0, %v536
  %v538 = vpop.f32.mrb[0].mxu0
  %v539 = vpop.f32.mrb[0].mxu0
  %v540 = vadd.f32 0.0, %v539
  %v541 = vpop.f32.mrb[0].mxu0
  %542 = vmatprep.mubr.bf16.mxu0 %v273
  %543 = vmatmul.mubr.bf16.gmra.mrb[0].mxu0 %v272
  %v544 = vpop.f32.mrb[0].mxu0
  %v545 = vadd.f32 0.0, %v544
  %v546 = vpop.f32.mrb[0].mxu0
  %v547 = vpop.f32.mrb[0].mxu0
  %v548 = vadd.f32 0.0, %v547
  %v549 = vpop.f32.mrb[0].mxu0
  %550 = vmatprep.mubr.bf16.mxu0 %v275
  %551 = vmatmul.mubr.bf16.gmra.mrb[0].mxu0 %v274
  %v552 = vpop.f32.mrb[0].mxu0
  %v553 = vadd.f32 0.0, %v552
  %v554 = vpop.f32.mrb[0].mxu0
  %v555 = vpop.f32.mrb[0].mxu0
  %v556 = vadd.f32 0.0, %v555
  %v557 = vpop.f32.mrb[0].mxu0
  %558 = vmatprep.mubr.bf16.mxu0 %v277
  %559 = vmatmul.mubr.bf16.gmra.mrb[0].mxu0 %v276
  %v560 = vpop.f32.mrb[0].mxu0
  %v561 = vadd.f32 0.0, %v560
  %v562 = vpop.f32.mrb[0].mxu0
  %v563 = vpop.f32.mrb[0].mxu0
  %v564 = vadd.f32 0.0, %v563
  %v565 = vpop.f32.mrb[0].mxu0
  %566 = vdwg.mxu0
  %v567 = vadd.f32 %v54, %v441
  %v568 = vadd.f32 %v55, %v444
  %v569 = vadd.f32 %v56, %v449
  %v570 = vadd.f32 %v57, %v452
  %v571 = vadd.f32 %v58, %v457
  %v572 = vadd.f32 %v59, %v460
  %v573 = vadd.f32 %v60, %v465
  %v574 = vadd.f32 %v61, %v468
  %v575 = vadd.f32 %v62, %v473
  %v576 = vadd.f32 %v63, %v476
  %v577 = vadd.f32 %v64, %v481
  %v578 = vadd.f32 %v65, %v484
  %v579 = vadd.f32 %v66, %v489
  %v580 = vadd.f32 %v67, %v492
  %v581 = vadd.f32 %v68, %v497
  %v582 = vadd.f32 %v69, %v500
  %v583 = vadd.f32 %v70, %v505
  %v584 = vadd.f32 %v71, %v508
  %v585 = vadd.f32 %v72, %v513
  %v586 = vadd.f32 %v73, %v516
  %v587 = vadd.f32 %v74, %v521
  %v588 = vadd.f32 %v75, %v524
  %v589 = vadd.f32 %v76, %v529
  %v590 = vadd.f32 %v77, %v532
  %v591 = vadd.f32 %v78, %v537
  %v592 = vadd.f32 %v79, %v540
  %v593 = vadd.f32 %v80, %v545
  %v594 = vadd.f32 %v81, %v548
  %v595 = vadd.f32 %v82, %v553
  %v596 = vadd.f32 %v83, %v556
  %v597 = vadd.f32 %v84, %v561
  %v598 = vadd.f32 %v85, %v564
  %599 = vst [vmem:[#allocation2] sm:$0xff] %v567
  %600 = vst [vmem:[#allocation2 + $0x8] sm:$0xff] %v568
  %601 = vst [vmem:[#allocation2 + $0x10] sm:$0xff] %v569
  %602 = vst [vmem:[#allocation2 + $0x18] sm:$0xff] %v570
  %603 = vst [vmem:[#allocation2 + $0x20] sm:$0xff] %v571
  %604 = vst [vmem:[#allocation2 + $0x28] sm:$0xff] %v572
  %605 = vst [vmem:[#allocation2 + $0x30] sm:$0xff] %v573
  %606 = vst [vmem:[#allocation2 + $0x38] sm:$0xff] %v574
  %607 = vst [vmem:[#allocation2 + $0x40] sm:$0xff] %v575
  %608 = vst [vmem:[#allocation2 + $0x48] sm:$0xff] %v576
  %609 = vst [vmem:[#allocation2 + $0x50] sm:$0xff] %v577
  %610 = vst [vmem:[#allocation2 + $0x58] sm:$0xff] %v578
  %611 = vst [vmem:[#allocation2 + $0x60] sm:$0xff] %v579
  %612 = vst [vmem:[#allocation2 + $0x68] sm:$0xff] %v580
  %613 = vst [vmem:[#allocation2 + $0x70] sm:$0xff] %v581
  %614 = vst [vmem:[#allocation2 + $0x78] sm:$0xff] %v582
  %615 = vst [vmem:[#allocation2 + $0x80] sm:$0xff] %v583
  %616 = vst [vmem:[#allocation2 + $0x88] sm:$0xff] %v584
  %617 = vst [vmem:[#allocation2 + $0x90] sm:$0xff] %v585
  %618 = vst [vmem:[#allocation2 + $0x98] sm:$0xff] %v586
  %619 = vst [vmem:[#allocation2 + $0xa0] sm:$0xff] %v587
  %620 = vst [vmem:[#allocation2 + $0xa8] sm:$0xff] %v588
  %621 = vst [vmem:[#allocation2 + $0xb0] sm:$0xff] %v589
  %622 = vst [vmem:[#allocation2 + $0xb8] sm:$0xff] %v590
  %623 = vst [vmem:[#allocation2 + $0xc0] sm:$0xff] %v591
  %624 = vst [vmem:[#allocation2 + $0xc8] sm:$0xff] %v592
  %625 = vst [vmem:[#allocation2 + $0xd0] sm:$0xff] %v593
  %626 = vst [vmem:[#allocation2 + $0xd8] sm:$0xff] %v594
  %627 = vst [vmem:[#allocation2 + $0xe0] sm:$0xff] %v595
  %628 = vst [vmem:[#allocation2 + $0xe8] sm:$0xff] %v596
  %629 = vst [vmem:[#allocation2 + $0xf0] sm:$0xff] %v597
  %630 = vst [vmem:[#allocation2 + $0xf8] sm:$0xff] %v598
  // Predicated region
  $region22: #{gmdn_transition_forward.5} parent=0 // pred_check
    %p631 = pneg %p18
  $region23: #{gmdn_transition_forward.5} parent=0 // pred_check_branch
    %633 = sbr.rel (%p631) target = $region25
  $region24: #{gmdn_transition_forward.5} parent=0 // pred_region
    %v634 = vld [vmem:[#allocation2] sm:$0xff]
    %v635 = vld [vmem:[#allocation2 + $0x8] sm:$0xff]
    %v636 = vld [vmem:[#allocation2 + $0x10] sm:$0xff]
    %v637 = vld [vmem:[#allocation2 + $0x18] sm:$0xff]
    %v638 = vld [vmem:[#allocation2 + $0x20] sm:$0xff]
    %v639 = vld [vmem:[#allocation2 + $0x28] sm:$0xff]
    %v640 = vld [vmem:[#allocation2 + $0x30] sm:$0xff]
    %v641 = vld [vmem:[#allocation2 + $0x38] sm:$0xff]
    %v642 = vld [vmem:[#allocation2 + $0x40] sm:$0xff]
    %v643 = vld [vmem:[#allocation2 + $0x48] sm:$0xff]
    %v644 = vld [vmem:[#allocation2 + $0x50] sm:$0xff]
    %v645 = vld [vmem:[#allocation2 + $0x58] sm:$0xff]
    %v646 = vld [vmem:[#allocation2 + $0x60] sm:$0xff]
    %v647 = vld [vmem:[#allocation2 + $0x68] sm:$0xff]
    %v648 = vld [vmem:[#allocation2 + $0x70] sm:$0xff]
    %v649 = vld [vmem:[#allocation2 + $0x78] sm:$0xff]
    %v650 = vld [vmem:[#allocation2 + $0x80] sm:$0xff]
    %v651 = vld [vmem:[#allocation2 + $0x88] sm:$0xff]
    %v652 = vld [vmem:[#allocation2 + $0x90] sm:$0xff]
    %v653 = vld [vmem:[#allocation2 + $0x98] sm:$0xff]
    %v654 = vld [vmem:[#allocation2 + $0xa0] sm:$0xff]
    %v655 = vld [vmem:[#allocation2 + $0xa8] sm:$0xff]
    %v656 = vld [vmem:[#allocation2 + $0xb0] sm:$0xff]
    %v657 = vld [vmem:[#allocation2 + $0xb8] sm:$0xff]
    %v658 = vld [vmem:[#allocation2 + $0xc0] sm:$0xff]
    %v659 = vld [vmem:[#allocation2 + $0xc8] sm:$0xff]
    %v660 = vld [vmem:[#allocation2 + $0xd0] sm:$0xff]
    %v661 = vld [vmem:[#allocation2 + $0xd8] sm:$0xff]
    %v662 = vld [vmem:[#allocation2 + $0xe0] sm:$0xff]
    %v663 = vld [vmem:[#allocation2 + $0xe8] sm:$0xff]
    %v664 = vld [vmem:[#allocation2 + $0xf0] sm:$0xff]
    %v665 = vld [vmem:[#allocation2 + $0xf8] sm:$0xff]
    %v666 = vpack.c.bf16 %v635, %v634
    %v667 = vpack.c.bf16 %v637, %v636
    %v668 = vpack.c.bf16 %v639, %v638
    %v669 = vpack.c.bf16 %v641, %v640
    %v670 = vpack.c.bf16 %v643, %v642
    %v671 = vpack.c.bf16 %v645, %v644
    %v672 = vpack.c.bf16 %v647, %v646
    %v673 = vpack.c.bf16 %v649, %v648
    %v674 = vpack.c.bf16 %v651, %v650
    %v675 = vpack.c.bf16 %v653, %v652
    %v676 = vpack.c.bf16 %v655, %v654
    %v677 = vpack.c.bf16 %v657, %v656
    %v678 = vpack.c.bf16 %v659, %v658
    %v679 = vpack.c.bf16 %v661, %v660
    %v680 = vpack.c.bf16 %v663, %v662
    %v681 = vpack.c.bf16 %v665, %v664
    %v682 = vld [vmem:[%s2] sm:$0xf]
    %v683 = vld [vmem:[%s2 + $0x4] sm:$0xf]
    %v684 = vld [vmem:[%s2 + $0x8] sm:$0xf]
    %v685 = vld [vmem:[%s2 + $0xc] sm:$0xf]
    %v686 = vld [vmem:[%s2 + $0x10] sm:$0xf]
    %v687 = vld [vmem:[%s2 + $0x14] sm:$0xf]
    %v688 = vld [vmem:[%s2 + $0x18] sm:$0xf]
    %v689 = vld [vmem:[%s2 + $0x1c] sm:$0xf]
    %v690 = vld [vmem:[%s2 + $0x20] sm:$0xf]
    %v691 = vld [vmem:[%s2 + $0x24] sm:$0xf]
    %v692 = vld [vmem:[%s2 + $0x28] sm:$0xf]
    %v693 = vld [vmem:[%s2 + $0x2c] sm:$0xf]
    %v694 = vld [vmem:[%s2 + $0x30] sm:$0xf]
    %v695 = vld [vmem:[%s2 + $0x34] sm:$0xf]
    %v696 = vld [vmem:[%s2 + $0x38] sm:$0xf]
    %v697 = vld [vmem:[%s2 + $0x3c] sm:$0xf]
    %v714 = vunpack.c.l.b16 %v682
    %v715 = vunpack.c.l.b16 %v683
    %v716 = vunpack.c.l.b16 %v684
    %v717 = vunpack.c.l.b16 %v685
    %v718 = vunpack.c.l.b16 %v686
    %v719 = vunpack.c.l.b16 %v687
    %v720 = vunpack.c.l.b16 %v688
    %v721 = vunpack.c.l.b16 %v689
    %v722 = vunpack.c.l.b16 %v690
    %v723 = vunpack.c.l.b16 %v691
    %v724 = vunpack.c.l.b16 %v692
    %v725 = vunpack.c.l.b16 %v693
    %v726 = vunpack.c.l.b16 %v694
    %v727 = vunpack.c.l.b16 %v695
    %v728 = vunpack.c.l.b16 %v696
    %v729 = vunpack.c.l.b16 %v697
    %v730 = vpack.c.b16 %v715, %v714
    %v731 = vpack.c.b16 %v717, %v716
    %v732 = vpack.c.b16 %v719, %v718
    %v733 = vpack.c.b16 %v721, %v720
    %v734 = vpack.c.b16 %v723, %v722
    %v735 = vpack.c.b16 %v725, %v724
    %v736 = vpack.c.b16 %v727, %v726
    %v737 = vpack.c.b16 %v729, %v728
    %746 = vmatprep.subr.bf16.mxu0 0
    %747 = vmatpush1.bf16.msra.mxu0 %v730
    %748 = vmatprep.subr.bf16.mxu0 0
    %749 = vmatpush1.bf16.msra.mxu0 %v731
    %750 = vmatprep.subr.bf16.mxu0 0
    %751 = vmatpush1.bf16.msra.mxu0 %v732
    %752 = vmatprep.subr.bf16.mxu0 0
    %753 = vmatpush1.bf16.msra.mxu0 %v733
    %754 = vmatprep.subr.bf16.mxu0 0
    %755 = vmatpush1.bf16.msra.mxu0 %v734
    %756 = vmatprep.subr.bf16.mxu0 0
    %757 = vmatpush1.bf16.msra.mxu0 %v735
    %758 = vmatprep.subr.bf16.mxu0 0
    %759 = vmatpush1.bf16.msra.mxu0 %v736
    %760 = vmatprep.subr.bf16.mxu0 0
    %761 = vmatpush1.bf16.msra.mxu0 %v737
    %762 = vmatprep.subr.bf16.mxu0 0
    %763 = vmatpush1.bf16.msra.mxu0 0
    %764 = vmatprep.subr.bf16.mxu0 0
    %765 = vmatpush1.bf16.msra.mxu0 0
    %766 = vmatprep.subr.bf16.mxu0 0
    %767 = vmatpush1.bf16.msra.mxu0 0
    %768 = vmatprep.subr.bf16.mxu0 0
    %769 = vmatpush1.bf16.msra.mxu0 0
    %770 = vmatprep.subr.bf16.mxu0 0
    %771 = vmatpush1.bf16.msra.mxu0 0
    %772 = vmatprep.subr.bf16.mxu0 0
    %773 = vmatpush1.bf16.msra.mxu0 0
    %774 = vmatprep.subr.bf16.mxu0 0
    %775 = vmatpush1.bf16.msra.mxu0 0
    %776 = vmatprep.subr.bf16.mxu0 0
    %777 = vmatpush1.bf16.msra.mxu0 0
    %778 = vmatprep.mubr.bf16.mxu0 0
    %779 = vmatmul.mubr.bf16.gmra.mrb[0].mxu0 %v666
    %v780 = vpop.f32.mrb[0].mxu0
    %v781 = vadd.f32 0.0, %v780
    %v782 = vpop.f32.mrb[0].mxu0
    %v783 = vpop.f32.mrb[0].mxu0
    %v784 = vadd.f32 0.0, %v783
    %v785 = vpop.f32.mrb[0].mxu0
    %786 = vmatprep.mubr.bf16.mxu0 0
    %787 = vmatmul.mubr.bf16.gmra.mrb[0].mxu0 %v667
    %v788 = vpop.f32.mrb[0].mxu0
    %v789 = vadd.f32 0.0, %v788
    %v790 = vpop.f32.mrb[0].mxu0
    %v791 = vpop.f32.mrb[0].mxu0
    %v792 = vadd.f32 0.0, %v791
    %v793 = vpop.f32.mrb[0].mxu0
    %794 = vmatprep.mubr.bf16.mxu0 0
    %795 = vmatmul.mubr.bf16.gmra.mrb[0].mxu0 %v668
    %v796 = vpop.f32.mrb[0].mxu0
    %v797 = vadd.f32 0.0, %v796
    %v798 = vpop.f32.mrb[0].mxu0
    %v799 = vpop.f32.mrb[0].mxu0
    %v800 = vadd.f32 0.0, %v799
    %v801 = vpop.f32.mrb[0].mxu0
    %802 = vmatprep.mubr.bf16.mxu0 0
    %803 = vmatmul.mubr.bf16.gmra.mrb[0].mxu0 %v669
    %v804 = vpop.f32.mrb[0].mxu0
    %v805 = vadd.f32 0.0, %v804
    %v806 = vpop.f32.mrb[0].mxu0
    %v807 = vpop.f32.mrb[0].mxu0
    %v808 = vadd.f32 0.0, %v807
    %v809 = vpop.f32.mrb[0].mxu0
    %810 = vmatprep.mubr.bf16.mxu0 0
    %811 = vmatmul.mubr.bf16.gmra.mrb[0].mxu0 %v670
    %v812 = vpop.f32.mrb[0].mxu0
    %v813 = vadd.f32 0.0, %v812
    %v814 = vpop.f32.mrb[0].mxu0
    %v815 = vpop.f32.mrb[0].mxu0
    %v816 = vadd.f32 0.0, %v815
    %v817 = vpop.f32.mrb[0].mxu0
    %818 = vmatprep.mubr.bf16.mxu0 0
    %819 = vmatmul.mubr.bf16.gmra.mrb[0].mxu0 %v671
    %v820 = vpop.f32.mrb[0].mxu0
    %v821 = vadd.f32 0.0, %v820
    %v822 = vpop.f32.mrb[0].mxu0
    %v823 = vpop.f32.mrb[0].mxu0
    %v824 = vadd.f32 0.0, %v823
    %v825 = vpop.f32.mrb[0].mxu0
    %826 = vmatprep.mubr.bf16.mxu0 0
    %827 = vmatmul.mubr.bf16.gmra.mrb[0].mxu0 %v672
    %v828 = vpop.f32.mrb[0].mxu0
    %v829 = vadd.f32 0.0, %v828
    %v830 = vpop.f32.mrb[0].mxu0
    %v831 = vpop.f32.mrb[0].mxu0
    %v832 = vadd.f32 0.0, %v831
    %v833 = vpop.f32.mrb[0].mxu0
    %834 = vmatprep.mubr.bf16.mxu0 0
    %835 = vmatmul.mubr.bf16.gmra.mrb[0].mxu0 %v673
    %v836 = vpop.f32.mrb[0].mxu0
    %v837 = vadd.f32 0.0, %v836
    %v838 = vpop.f32.mrb[0].mxu0
    %v839 = vpop.f32.mrb[0].mxu0
    %v840 = vadd.f32 0.0, %v839
    %v841 = vpop.f32.mrb[0].mxu0
    %842 = vmatprep.mubr.bf16.mxu0 0
    %843 = vmatmul.mubr.bf16.gmra.mrb[0].mxu0 %v674
    %v844 = vpop.f32.mrb[0].mxu0
    %v845 = vadd.f32 0.0, %v844
    %v846 = vpop.f32.mrb[0].mxu0
    %v847 = vpop.f32.mrb[0].mxu0
    %v848 = vadd.f32 0.0, %v847
    %v849 = vpop.f32.mrb[0].mxu0
    %850 = vmatprep.mubr.bf16.mxu0 0
    %851 = vmatmul.mubr.bf16.gmra.mrb[0].mxu0 %v675
    %v852 = vpop.f32.mrb[0].mxu0
    %v853 = vadd.f32 0.0, %v852
    %v854 = vpop.f32.mrb[0].mxu0
    %v855 = vpop.f32.mrb[0].mxu0
    %v856 = vadd.f32 0.0, %v855
    %v857 = vpop.f32.mrb[0].mxu0
    %858 = vmatprep.mubr.bf16.mxu0 0
    %859 = vmatmul.mubr.bf16.gmra.mrb[0].mxu0 %v676
    %v860 = vpop.f32.mrb[0].mxu0
    %v861 = vadd.f32 0.0, %v860
    %v862 = vpop.f32.mrb[0].mxu0
    %v863 = vpop.f32.mrb[0].mxu0
    %v864 = vadd.f32 0.0, %v863
    %v865 = vpop.f32.mrb[0].mxu0
    %866 = vmatprep.mubr.bf16.mxu0 0
    %867 = vmatmul.mubr.bf16.gmra.mrb[0].mxu0 %v677
    %v868 = vpop.f32.mrb[0].mxu0
    %v869 = vadd.f32 0.0, %v868
    %v870 = vpop.f32.mrb[0].mxu0
    %v871 = vpop.f32.mrb[0].mxu0
    %v872 = vadd.f32 0.0, %v871
    %v873 = vpop.f32.mrb[0].mxu0
    %874 = vmatprep.mubr.bf16.mxu0 0
    %875 = vmatmul.mubr.bf16.gmra.mrb[0].mxu0 %v678
    %v876 = vpop.f32.mrb[0].mxu0
    %v877 = vadd.f32 0.0, %v876
    %v878 = vpop.f32.mrb[0].mxu0
    %v879 = vpop.f32.mrb[0].mxu0
    %v880 = vadd.f32 0.0, %v879
    %v881 = vpop.f32.mrb[0].mxu0
    %882 = vmatprep.mubr.bf16.mxu0 0
    %883 = vmatmul.mubr.bf16.gmra.mrb[0].mxu0 %v679
    %v884 = vpop.f32.mrb[0].mxu0
    %v885 = vadd.f32 0.0, %v884
    %v886 = vpop.f32.mrb[0].mxu0
    %v887 = vpop.f32.mrb[0].mxu0
    %v888 = vadd.f32 0.0, %v887
    %v889 = vpop.f32.mrb[0].mxu0
    %890 = vmatprep.mubr.bf16.mxu0 0
    %891 = vmatmul.mubr.bf16.gmra.mrb[0].mxu0 %v680
    %v892 = vpop.f32.mrb[0].mxu0
    %v893 = vadd.f32 0.0, %v892
    %v894 = vpop.f32.mrb[0].mxu0
    %v895 = vpop.f32.mrb[0].mxu0
    %v896 = vadd.f32 0.0, %v895
    %v897 = vpop.f32.mrb[0].mxu0
    %898 = vmatprep.mubr.bf16.mxu0 0
    %899 = vmatmul.mubr.bf16.gmra.mrb[0].mxu0 %v681
    %v900 = vpop.f32.mrb[0].mxu0
    %v901 = vadd.f32 0.0, %v900
    %v902 = vpop.f32.mrb[0].mxu0
    %v903 = vpop.f32.mrb[0].mxu0
    %v904 = vadd.f32 0.0, %v903
    %v905 = vpop.f32.mrb[0].mxu0
    %906 = vdwg.mxu0
    %v907 = vmax.f32 %v781, 0.0
    %v908 = vmax.f32 %v784, 0.0
    %v909 = vmax.f32 %v789, 0.0
    %v910 = vmax.f32 %v792, 0.0
    %v911 = vmax.f32 %v797, 0.0
    %v912 = vmax.f32 %v800, 0.0
    %v913 = vmax.f32 %v805, 0.0
    %v914 = vmax.f32 %v808, 0.0
    %v915 = vmax.f32 %v813, 0.0
    %v916 = vmax.f32 %v816, 0.0
    %v917 = vmax.f32 %v821, 0.0
    %v918 = vmax.f32 %v824, 0.0
    %v919 = vmax.f32 %v829, 0.0
    %v920 = vmax.f32 %v832, 0.0
    %v921 = vmax.f32 %v837, 0.0
    %v922 = vmax.f32 %v840, 0.0
    %v923 = vmax.f32 %v845, 0.0
    %v924 = vmax.f32 %v848, 0.0
    %v925 = vmax.f32 %v853, 0.0
    %v926 = vmax.f32 %v856, 0.0
    %v927 = vmax.f32 %v861, 0.0
    %v928 = vmax.f32 %v864, 0.0
    %v929 = vmax.f32 %v869, 0.0
    %v930 = vmax.f32 %v872, 0.0
    %v931 = vmax.f32 %v877, 0.0
    %v932 = vmax.f32 %v880, 0.0
    %v933 = vmax.f32 %v885, 0.0
    %v934 = vmax.f32 %v888, 0.0
    %v935 = vmax.f32 %v893, 0.0
    %v936 = vmax.f32 %v896, 0.0
    %v937 = vmax.f32 %v901, 0.0
    %v938 = vmax.f32 %v904, 0.0
    %v939 = vpack.c.bf16 %v908, %v907
    %v940 = vpack.c.bf16 %v910, %v909
    %v941 = vpack.c.bf16 %v912, %v911
    %v942 = vpack.c.bf16 %v914, %v913
    %v943 = vpack.c.bf16 %v916, %v915
    %v944 = vpack.c.bf16 %v918, %v917
    %v945 = vpack.c.bf16 %v920, %v919
    %v946 = vpack.c.bf16 %v922, %v921
    %v947 = vpack.c.bf16 %v924, %v923
    %v948 = vpack.c.bf16 %v926, %v925
    %v949 = vpack.c.bf16 %v928, %v927
    %v950 = vpack.c.bf16 %v930, %v929
    %v951 = vpack.c.bf16 %v932, %v931
    %v952 = vpack.c.bf16 %v934, %v933
    %v953 = vpack.c.bf16 %v936, %v935
    %v954 = vpack.c.bf16 %v938, %v937
    %v955 = vld [vmem:[%s3] sm:$0xf]
    %v956 = vld [vmem:[%s3 + $0x4] sm:$0xf]
    %v957 = vld [vmem:[%s3 + $0x8] sm:$0xf]
    %v958 = vld [vmem:[%s3 + $0xc] sm:$0xf]
    %v959 = vld [vmem:[%s3 + $0x10] sm:$0xf]
    %v960 = vld [vmem:[%s3 + $0x14] sm:$0xf]
    %v961 = vld [vmem:[%s3 + $0x18] sm:$0xf]
    %v962 = vld [vmem:[%s3 + $0x1c] sm:$0xf]
    %v963 = vld [vmem:[%s3 + $0x20] sm:$0xf]
    %v964 = vld [vmem:[%s3 + $0x24] sm:$0xf]
    %v965 = vld [vmem:[%s3 + $0x28] sm:$0xf]
    %v966 = vld [vmem:[%s3 + $0x2c] sm:$0xf]
    %v967 = vld [vmem:[%s3 + $0x30] sm:$0xf]
    %v968 = vld [vmem:[%s3 + $0x34] sm:$0xf]
    %v969 = vld [vmem:[%s3 + $0x38] sm:$0xf]
    %v970 = vld [vmem:[%s3 + $0x3c] sm:$0xf]
    %v987 = vunpack.c.l.b16 %v955
    %v988 = vunpack.c.l.b16 %v956
    %v989 = vunpack.c.l.b16 %v957
    %v990 = vunpack.c.l.b16 %v958
    %v991 = vunpack.c.l.b16 %v959
    %v992 = vunpack.c.l.b16 %v960
    %v993 = vunpack.c.l.b16 %v961
    %v994 = vunpack.c.l.b16 %v962
    %v995 = vunpack.c.l.b16 %v963
    %v996 = vunpack.c.l.b16 %v964
    %v997 = vunpack.c.l.b16 %v965
    %v998 = vunpack.c.l.b16 %v966
    %v999 = vunpack.c.l.b16 %v967
    %v1000 = vunpack.c.l.b16 %v968
    %v1001 = vunpack.c.l.b16 %v969
    %v1002 = vunpack.c.l.b16 %v970
    %v1003 = vpack.c.b16 %v988, %v987
    %v1004 = vpack.c.b16 %v990, %v989
    %v1005 = vpack.c.b16 %v992, %v991
    %v1006 = vpack.c.b16 %v994, %v993
    %v1007 = vpack.c.b16 %v996, %v995
    %v1008 = vpack.c.b16 %v998, %v997
    %v1009 = vpack.c.b16 %v1000, %v999
    %v1010 = vpack.c.b16 %v1002, %v1001
    %1019 = vmatprep.subr.bf16.mxu0 0
    %1020 = vmatpush1.bf16.msra.mxu0 %v1003
    %1021 = vmatprep.subr.bf16.mxu0 0
    %1022 = vmatpush1.bf16.msra.mxu0 %v1004
    %1023 = vmatprep.subr.bf16.mxu0 0
    %1024 = vmatpush1.bf16.msra.mxu0 %v1005
    %1025 = vmatprep.subr.bf16.mxu0 0
    %1026 = vmatpush1.bf16.msra.mxu0 %v1006
    %1027 = vmatprep.subr.bf16.mxu0 0
    %1028 = vmatpush1.bf16.msra.mxu0 %v1007
    %1029 = vmatprep.subr.bf16.mxu0 0
    %1030 = vmatpush1.bf16.msra.mxu0 %v1008
    %1031 = vmatprep.subr.bf16.mxu0 0
    %1032 = vmatpush1.bf16.msra.mxu0 %v1009
    %1033 = vmatprep.subr.bf16.mxu0 0
    %1034 = vmatpush1.bf16.msra.mxu0 %v1010
    %1035 = vmatprep.subr.bf16.mxu0 0
    %1036 = vmatpush1.bf16.msra.mxu0 0
    %1037 = vmatprep.subr.bf16.mxu0 0
    %1038 = vmatpush1.bf16.msra.mxu0 0
    %1039 = vmatprep.subr.bf16.mxu0 0
    %1040 = vmatpush1.bf16.msra.mxu0 0
    %1041 = vmatprep.subr.bf16.mxu0 0
    %1042 = vmatpush1.bf16.msra.mxu0 0
    %1043 = vmatprep.subr.bf16.mxu0 0
    %1044 = vmatpush1.bf16.msra.mxu0 0
    %1045 = vmatprep.subr.bf16.mxu0 0
    %1046 = vmatpush1.bf16.msra.mxu0 0
    %1047 = vmatprep.subr.bf16.mxu0 0
    %1048 = vmatpush1.bf16.msra.mxu0 0
    %1049 = vmatprep.subr.bf16.mxu0 0
    %1050 = vmatpush1.bf16.msra.mxu0 0
    %1051 = vmatprep.mubr.bf16.mxu0 0
    %1052 = vmatmul.mubr.bf16.gmra.mrb[0].mxu0 %v939
    %v1053 = vpop.f32.mrb[0].mxu0
    %v1054 = vadd.f32 0.0, %v1053
    %v1055 = vpop.f32.mrb[0].mxu0
    %v1056 = vpop.f32.mrb[0].mxu0
    %v1057 = vadd.f32 0.0, %v1056
    %v1058 = vpop.f32.mrb[0].mxu0
    %1059 = vmatprep.mubr.bf16.mxu0 0
    %1060 = vmatmul.mubr.bf16.gmra.mrb[0].mxu0 %v940
    %v1061 = vpop.f32.mrb[0].mxu0
    %v1062 = vadd.f32 0.0, %v1061
    %v1063 = vpop.f32.mrb[0].mxu0
    %v1064 = vpop.f32.mrb[0].mxu0
    %v1065 = vadd.f32 0.0, %v1064
    %v1066 = vpop.f32.mrb[0].mxu0
    %1067 = vmatprep.mubr.bf16.mxu0 0
    %1068 = vmatmul.mubr.bf16.gmra.mrb[0].mxu0 %v941
    %v1069 = vpop.f32.mrb[0].mxu0
    %v1070 = vadd.f32 0.0, %v1069
    %v1071 = vpop.f32.mrb[0].mxu0
    %v1072 = vpop.f32.mrb[0].mxu0
    %v1073 = vadd.f32 0.0, %v1072
    %v1074 = vpop.f32.mrb[0].mxu0
    %1075 = vmatprep.mubr.bf16.mxu0 0
    %1076 = vmatmul.mubr.bf16.gmra.mrb[0].mxu0 %v942
    %v1077 = vpop.f32.mrb[0].mxu0
    %v1078 = vadd.f32 0.0, %v1077
    %v1079 = vpop.f32.mrb[0].mxu0
    %v1080 = vpop.f32.mrb[0].mxu0
    %v1081 = vadd.f32 0.0, %v1080
    %v1082 = vpop.f32.mrb[0].mxu0
    %1083 = vmatprep.mubr.bf16.mxu0 0
    %1084 = vmatmul.mubr.bf16.gmra.mrb[0].mxu0 %v943
    %v1085 = vpop.f32.mrb[0].mxu0
    %v1086 = vadd.f32 0.0, %v1085
    %v1087 = vpop.f32.mrb[0].mxu0
    %v1088 = vpop.f32.mrb[0].mxu0
    %v1089 = vadd.f32 0.0, %v1088
    %v1090 = vpop.f32.mrb[0].mxu0
    %1091 = vmatprep.mubr.bf16.mxu0 0
    %1092 = vmatmul.mubr.bf16.gmra.mrb[0].mxu0 %v944
    %v1093 = vpop.f32.mrb[0].mxu0
    %v1094 = vadd.f32 0.0, %v1093
    %v1095 = vpop.f32.mrb[0].mxu0
    %v1096 = vpop.f32.mrb[0].mxu0
    %v1097 = vadd.f32 0.0, %v1096
    %v1098 = vpop.f32.mrb[0].mxu0
    %1099 = vmatprep.mubr.bf16.mxu0 0
    %1100 = vmatmul.mubr.bf16.gmra.mrb[0].mxu0 %v945
    %v1101 = vpop.f32.mrb[0].mxu0
    %v1102 = vadd.f32 0.0, %v1101
    %v1103 = vpop.f32.mrb[0].mxu0
    %v1104 = vpop.f32.mrb[0].mxu0
    %v1105 = vadd.f32 0.0, %v1104
    %v1106 = vpop.f32.mrb[0].mxu0
    %1107 = vmatprep.mubr.bf16.mxu0 0
    %1108 = vmatmul.mubr.bf16.gmra.mrb[0].mxu0 %v946
    %v1109 = vpop.f32.mrb[0].mxu0
    %v1110 = vadd.f32 0.0, %v1109
    %v1111 = vpop.f32.mrb[0].mxu0
    %v1112 = vpop.f32.mrb[0].mxu0
    %v1113 = vadd.f32 0.0, %v1112
    %v1114 = vpop.f32.mrb[0].mxu0
    %1115 = vmatprep.mubr.bf16.mxu0 0
    %1116 = vmatmul.mubr.bf16.gmra.mrb[0].mxu0 %v947
    %v1117 = vpop.f32.mrb[0].mxu0
    %v1118 = vadd.f32 0.0, %v1117
    %v1119 = vpop.f32.mrb[0].mxu0
    %v1120 = vpop.f32.mrb[0].mxu0
    %v1121 = vadd.f32 0.0, %v1120
    %v1122 = vpop.f32.mrb[0].mxu0
    %1123 = vmatprep.mubr.bf16.mxu0 0
    %1124 = vmatmul.mubr.bf16.gmra.mrb[0].mxu0 %v948
    %v1125 = vpop.f32.mrb[0].mxu0
    %v1126 = vadd.f32 0.0, %v1125
    %v1127 = vpop.f32.mrb[0].mxu0
    %v1128 = vpop.f32.mrb[0].mxu0
    %v1129 = vadd.f32 0.0, %v1128
    %v1130 = vpop.f32.mrb[0].mxu0
    %1131 = vmatprep.mubr.bf16.mxu0 0
    %1132 = vmatmul.mubr.bf16.gmra.mrb[0].mxu0 %v949
    %v1133 = vpop.f32.mrb[0].mxu0
    %v1134 = vadd.f32 0.0, %v1133
    %v1135 = vpop.f32.mrb[0].mxu0
    %v1136 = vpop.f32.mrb[0].mxu0
    %v1137 = vadd.f32 0.0, %v1136
    %v1138 = vpop.f32.mrb[0].mxu0
    %1139 = vmatprep.mubr.bf16.mxu0 0
    %1140 = vmatmul.mubr.bf16.gmra.mrb[0].mxu0 %v950
    %v1141 = vpop.f32.mrb[0].mxu0
    %v1142 = vadd.f32 0.0, %v1141
    %v1143 = vpop.f32.mrb[0].mxu0
    %v1144 = vpop.f32.mrb[0].mxu0
    %v1145 = vadd.f32 0.0, %v1144
    %v1146 = vpop.f32.mrb[0].mxu0
    %1147 = vmatprep.mubr.bf16.mxu0 0
    %1148 = vmatmul.mubr.bf16.gmra.mrb[0].mxu0 %v951
    %v1149 = vpop.f32.mrb[0].mxu0
    %v1150 = vadd.f32 0.0, %v1149
    %v1151 = vpop.f32.mrb[0].mxu0
    %v1152 = vpop.f32.mrb[0].mxu0
    %v1153 = vadd.f32 0.0, %v1152
    %v1154 = vpop.f32.mrb[0].mxu0
    %1155 = vmatprep.mubr.bf16.mxu0 0
    %1156 = vmatmul.mubr.bf16.gmra.mrb[0].mxu0 %v952
    %v1157 = vpop.f32.mrb[0].mxu0
    %v1158 = vadd.f32 0.0, %v1157
    %v1159 = vpop.f32.mrb[0].mxu0
    %v1160 = vpop.f32.mrb[0].mxu0
    %v1161 = vadd.f32 0.0, %v1160
    %v1162 = vpop.f32.mrb[0].mxu0
    %1163 = vmatprep.mubr.bf16.mxu0 0
    %1164 = vmatmul.mubr.bf16.gmra.mrb[0].mxu0 %v953
    %v1165 = vpop.f32.mrb[0].mxu0
    %v1166 = vadd.f32 0.0, %v1165
    %v1167 = vpop.f32.mrb[0].mxu0
    %v1168 = vpop.f32.mrb[0].mxu0
    %v1169 = vadd.f32 0.0, %v1168
    %v1170 = vpop.f32.mrb[0].mxu0
    %1171 = vmatprep.mubr.bf16.mxu0 0
    %1172 = vmatmul.mubr.bf16.gmra.mrb[0].mxu0 %v954
    %v1173 = vpop.f32.mrb[0].mxu0
    %v1174 = vadd.f32 0.0, %v1173
    %v1175 = vpop.f32.mrb[0].mxu0
    %v1176 = vpop.f32.mrb[0].mxu0
    %v1177 = vadd.f32 0.0, %v1176
    %v1178 = vpop.f32.mrb[0].mxu0
    %1179 = vdwg.mxu0
    %v1180 = vmax.f32 %v1054, 0.0
    %v1181 = vmax.f32 %v1057, 0.0
    %v1182 = vmax.f32 %v1062, 0.0
    %v1183 = vmax.f32 %v1065, 0.0
    %v1184 = vmax.f32 %v1070, 0.0
    %v1185 = vmax.f32 %v1073, 0.0
    %v1186 = vmax.f32 %v1078, 0.0
    %v1187 = vmax.f32 %v1081, 0.0
    %v1188 = vmax.f32 %v1086, 0.0
    %v1189 = vmax.f32 %v1089, 0.0
    %v1190 = vmax.f32 %v1094, 0.0
    %v1191 = vmax.f32 %v1097, 0.0
    %v1192 = vmax.f32 %v1102, 0.0
    %v1193 = vmax.f32 %v1105, 0.0
    %v1194 = vmax.f32 %v1110, 0.0
    %v1195 = vmax.f32 %v1113, 0.0
    %v1196 = vmax.f32 %v1118, 0.0
    %v1197 = vmax.f32 %v1121, 0.0
    %v1198 = vmax.f32 %v1126, 0.0
    %v1199 = vmax.f32 %v1129, 0.0
    %v1200 = vmax.f32 %v1134, 0.0
    %v1201 = vmax.f32 %v1137, 0.0
    %v1202 = vmax.f32 %v1142, 0.0
    %v1203 = vmax.f32 %v1145, 0.0
    %v1204 = vmax.f32 %v1150, 0.0
    %v1205 = vmax.f32 %v1153, 0.0
    %v1206 = vmax.f32 %v1158, 0.0
    %v1207 = vmax.f32 %v1161, 0.0
    %v1208 = vmax.f32 %v1166, 0.0
    %v1209 = vmax.f32 %v1169, 0.0
    %v1210 = vmax.f32 %v1174, 0.0
    %v1211 = vmax.f32 %v1177, 0.0
    %v1212 = vpack.c.bf16 %v1181, %v1180
    %v1213 = vpack.c.bf16 %v1183, %v1182
    %v1214 = vpack.c.bf16 %v1185, %v1184
    %v1215 = vpack.c.bf16 %v1187, %v1186
    %v1216 = vpack.c.bf16 %v1189, %v1188
    %v1217 = vpack.c.bf16 %v1191, %v1190
    %v1218 = vpack.c.bf16 %v1193, %v1192
    %v1219 = vpack.c.bf16 %v1195, %v1194
    %v1220 = vpack.c.bf16 %v1197, %v1196
    %v1221 = vpack.c.bf16 %v1199, %v1198
    %v1222 = vpack.c.bf16 %v1201, %v1200
    %v1223 = vpack.c.bf16 %v1203, %v1202
    %v1224 = vpack.c.bf16 %v1205, %v1204
    %v1225 = vpack.c.bf16 %v1207, %v1206
    %v1226 = vpack.c.bf16 %v1209, %v1208
    %v1227 = vpack.c.bf16 %v1211, %v1210
    %v1244 = vunpack.c.l.b16 %v1212
    %v1245 = vunpack.c.h.b16 %v1212
    %v1246 = vunpack.c.l.b16 %v1213
    %v1247 = vunpack.c.h.b16 %v1213
    %v1248 = vunpack.c.l.b16 %v1214
    %v1249 = vunpack.c.h.b16 %v1214
    %v1250 = vunpack.c.l.b16 %v1215
    %v1251 = vunpack.c.h.b16 %v1215
    %v1252 = vunpack.c.l.b16 %v1216
    %v1253 = vunpack.c.h.b16 %v1216
    %v1254 = vunpack.c.l.b16 %v1217
    %v1255 = vunpack.c.h.b16 %v1217
    %v1256 = vunpack.c.l.b16 %v1218
    %v1257 = vunpack.c.h.b16 %v1218
    %v1258 = vunpack.c.l.b16 %v1219
    %v1259 = vunpack.c.h.b16 %v1219
    %v1260 = vunpack.c.l.b16 %v1220
    %v1261 = vunpack.c.h.b16 %v1220
    %v1262 = vunpack.c.l.b16 %v1221
    %v1263 = vunpack.c.h.b16 %v1221
    %v1264 = vunpack.c.l.b16 %v1222
    %v1265 = vunpack.c.h.b16 %v1222
    %v1266 = vunpack.c.l.b16 %v1223
    %v1267 = vunpack.c.h.b16 %v1223
    %v1268 = vunpack.c.l.b16 %v1224
    %v1269 = vunpack.c.h.b16 %v1224
    %v1270 = vunpack.c.l.b16 %v1225
    %v1271 = vunpack.c.h.b16 %v1225
    %v1272 = vunpack.c.l.b16 %v1226
    %v1273 = vunpack.c.h.b16 %v1226
    %v1274 = vunpack.c.l.b16 %v1227
    %v1275 = vunpack.c.h.b16 %v1227
    %v1276 = vpack.c.b16 %v1244, %v1244
    %v1277 = vpack.c.b16 %v1245, %v1245
    %v1278 = vpack.c.b16 %v1246, %v1246
    %v1279 = vpack.c.b16 %v1247, %v1247
    %v1280 = vpack.c.b16 %v1248, %v1248
    %v1281 = vpack.c.b16 %v1249, %v1249
    %v1282 = vpack.c.b16 %v1250, %v1250
    %v1283 = vpack.c.b16 %v1251, %v1251
    %v1284 = vpack.c.b16 %v1252, %v1252
    %v1285 = vpack.c.b16 %v1253, %v1253
    %v1286 = vpack.c.b16 %v1254, %v1254
    %v1287 = vpack.c.b16 %v1255, %v1255
    %v1288 = vpack.c.b16 %v1256, %v1256
    %v1289 = vpack.c.b16 %v1257, %v1257
    %v1290 = vpack.c.b16 %v1258, %v1258
    %v1291 = vpack.c.b16 %v1259, %v1259
    %v1292 = vpack.c.b16 %v1260, %v1260
    %v1293 = vpack.c.b16 %v1261, %v1261
    %v1294 = vpack.c.b16 %v1262, %v1262
    %v1295 = vpack.c.b16 %v1263, %v1263
    %v1296 = vpack.c.b16 %v1264, %v1264
    %v1297 = vpack.c.b16 %v1265, %v1265
    %v1298 = vpack.c.b16 %v1266, %v1266
    %v1299 = vpack.c.b16 %v1267, %v1267
    %v1300 = vpack.c.b16 %v1268, %v1268
    %v1301 = vpack.c.b16 %v1269, %v1269
    %v1302 = vpack.c.b16 %v1270, %v1270
    %v1303 = vpack.c.b16 %v1271, %v1271
    %v1304 = vpack.c.b16 %v1272, %v1272
    %v1305 = vpack.c.b16 %v1273, %v1273
    %v1306 = vpack.c.b16 %v1274, %v1274
    %v1307 = vpack.c.b16 %v1275, %v1275
    %1340 = vst [vmem:[%s4] sm:$0xf] %v1276
    %1341 = vst [vmem:[%s4 + $0x4] sm:$0xf] %v1277
    %1342 = vst [vmem:[%s4 + $0x8] sm:$0xf] %v1278
    %1343 = vst [vmem:[%s4 + $0xc] sm:$0xf] %v1279
    %1344 = vst [vmem:[%s4 + $0x10] sm:$0xf] %v1280
    %1345 = vst [vmem:[%s4 + $0x14] sm:$0xf] %v1281
    %1346 = vst [vmem:[%s4 + $0x18] sm:$0xf] %v1282
    %1347 = vst [vmem:[%s4 + $0x1c] sm:$0xf] %v1283
    %1348 = vst [vmem:[%s4 + $0x20] sm:$0xf] %v1284
    %1349 = vst [vmem:[%s4 + $0x24] sm:$0xf] %v1285
    %1350 = vst [vmem:[%s4 + $0x28] sm:$0xf] %v1286
    %1351 = vst [vmem:[%s4 + $0x2c] sm:$0xf] %v1287
    %1352 = vst [vmem:[%s4 + $0x30] sm:$0xf] %v1288
    %1353 = vst [vmem:[%s4 + $0x34] sm:$0xf] %v1289
    %1354 = vst [vmem:[%s4 + $0x38] sm:$0xf] %v1290
    %1355 = vst [vmem:[%s4 + $0x3c] sm:$0xf] %v1291
    %1356 = vst [vmem:[%s4 + $0x40] sm:$0xf] %v1292
    %1357 = vst [vmem:[%s4 + $0x44] sm:$0xf] %v1293
    %1358 = vst [vmem:[%s4 + $0x48] sm:$0xf] %v1294
    %1359 = vst [vmem:[%s4 + $0x4c] sm:$0xf] %v1295
    %1360 = vst [vmem:[%s4 + $0x50] sm:$0xf] %v1296
    %1361 = vst [vmem:[%s4 + $0x54] sm:$0xf] %v1297
    %1362 = vst [vmem:[%s4 + $0x58] sm:$0xf] %v1298
    %1363 = vst [vmem:[%s4 + $0x5c] sm:$0xf] %v1299
    %1364 = vst [vmem:[%s4 + $0x60] sm:$0xf] %v1300
    %1365 = vst [vmem:[%s4 + $0x64] sm:$0xf] %v1301
    %1366 = vst [vmem:[%s4 + $0x68] sm:$0xf] %v1302
    %1367 = vst [vmem:[%s4 + $0x6c] sm:$0xf] %v1303
    %1368 = vst [vmem:[%s4 + $0x70] sm:$0xf] %v1304
    %1369 = vst [vmem:[%s4 + $0x74] sm:$0xf] %v1305
    %1370 = vst [vmem:[%s4 + $0x78] sm:$0xf] %v1306
    %1371 = vst [vmem:[%s4 + $0x7c] sm:$0xf] %v1307
  $region25: #{gmdn_transition_forward.5} parent=0 // pred_fallthru
    _
  // Predicated region
  $region26: #{gmdn_transition_forward.5} parent=0 // pred_check
    _
  $region27: #{gmdn_transition_forward.5} parent=0 // pred_check_branch
    %1373 = sbr.rel (0) target = $region29
  $region28: #{gmdn_transition_forward.5} parent=0 // pred_region
    _
  $region29: #{gmdn_transition_forward.5} parent=0 // pred_fallthru
    _
  // Predicated region
  $region30: #{gmdn_transition_forward.5} parent=0 // pred_check
    _
  $region31: #{gmdn_transition_forward.5} parent=0 // pred_check_branch
    %1375 = sbr.rel (0) target = $region33
  $region32: #{gmdn_transition_forward.5} parent=0 // pred_region
    _
  $region33: #{gmdn_transition_forward.5} parent=0 // pred_fallthru
    _

// kernel: gmdn_transition_forward.7
$region0: #{gmdn_transition_forward.7}
  #allocation0 [shape = 'u32[]', space=smem, size = 0x4, offset = 0x4, fixed_abs, tag = 'smem constant byte address 0x4 - core index']
  #allocation1 [shape = 'u32[144,128]{1,0:T(1,128)}', space=vmem, size = 0x12000, scoped, tag = 'internal scratch']
  #allocation2 [shape = 'f32[8,128]{1,0:T(8,128)}', space=vmem, size = 0x1000, scoped, tag = 'scratch operand']
  %s0 = inlined_call_operand.vmem [shape: bf16[8,256], index: 0, kind: input, shape index: {}]
  %s1 = inlined_call_operand.vmem [shape: bf16[256,128], index: 1, kind: input, shape index: {}]
  %s2 = inlined_call_operand.vmem [shape: bf16[128,128], index: 2, kind: input, shape index: {}]
  %s3 = inlined_call_operand.vmem [shape: f32[1,128], index: 3, kind: input, shape index: {}]
  %s4 = inlined_call_operand.vmem [shape: f32[8,128], index: 4, kind: output, shape index: {}]
  %s5 = sld [smem:[#allocation0]]
  $region34: #{gmdn_transition_forward.7} parent=0
    _
  %s7 = ssub.s32 1, %s5
  %s8 = scalar_select 0, %s7, %s5
  // Predicated region
  $region2: #{gmdn_transition_forward.7} parent=0 // pred_check
    _
  $region3: #{gmdn_transition_forward.7} parent=0 // pred_check_branch
    %10 = sbr.rel (0) target = $region5
  $region4: #{gmdn_transition_forward.7} parent=0 // pred_region
    _
  $region5: #{gmdn_transition_forward.7} parent=0 // pred_fallthru
    _
  // Predicated region
  $region6: #{gmdn_transition_forward.7} parent=0 // pred_check
    _
  $region7: #{gmdn_transition_forward.7} parent=0 // pred_check_branch
    %12 = sbr.rel (0) target = $region9
  $region8: #{gmdn_transition_forward.7} parent=0 // pred_region
    _
  $region9: #{gmdn_transition_forward.7} parent=0 // pred_fallthru
    _
  // Predicated region
  $region10: #{gmdn_transition_forward.7} parent=0 // pred_check
    _
  $region11: #{gmdn_transition_forward.7} parent=0 // pred_check_branch
    %14 = sbr.rel (0) target = $region13
  $region12: #{gmdn_transition_forward.7} parent=0 // pred_region
    _
  $region13: #{gmdn_transition_forward.7} parent=0 // pred_fallthru
    _
  // Predicated region
  $region14: #{gmdn_transition_forward.7} parent=0 // pred_check
    _
  $region15: #{gmdn_transition_forward.7} parent=0 // pred_check_branch
    %16 = sbr.rel (0) target = $region17
  $region16: #{gmdn_transition_forward.7} parent=0 // pred_region
    _
  $region17: #{gmdn_transition_forward.7} parent=0 // pred_fallthru
    _
  %p18 = scmp.eq.s32.totalorder 0, 0
  // Predicated region
  $region18: #{gmdn_transition_forward.7} parent=0 // pred_check
    %p19 = pneg %p18
  $region19: #{gmdn_transition_forward.7} parent=0 // pred_check_branch
    %21 = sbr.rel (%p19) target = $region21
  $region20: #{gmdn_transition_forward.7} parent=0 // pred_region
    %22 = vst [vmem:[#allocation2] sm:$0xff] 0.0
  $region21: #{gmdn_transition_forward.7} parent=0 // pred_fallthru
    _
  %v23 = vld [vmem:[#allocation2] sm:$0xff]
  %v24 = vld [vmem:[%s0] sm:$0xff]
  %v25 = vld [vmem:[%s1] sm:$0xf]
  %v26 = vld [vmem:[%s1 + $0x4] sm:$0xf]
  %v27 = vld [vmem:[%s1 + $0x8] sm:$0xf]
  %v28 = vld [vmem:[%s1 + $0xc] sm:$0xf]
  %v29 = vld [vmem:[%s1 + $0x10] sm:$0xf]
  %v30 = vld [vmem:[%s1 + $0x14] sm:$0xf]
  %v31 = vld [vmem:[%s1 + $0x18] sm:$0xf]
  %v32 = vld [vmem:[%s1 + $0x1c] sm:$0xf]
  %v33 = vld [vmem:[%s1 + $0x20] sm:$0xf]
  %v34 = vld [vmem:[%s1 + $0x24] sm:$0xf]
  %v35 = vld [vmem:[%s1 + $0x28] sm:$0xf]
  %v36 = vld [vmem:[%s1 + $0x2c] sm:$0xf]
  %v37 = vld [vmem:[%s1 + $0x30] sm:$0xf]
  %v38 = vld [vmem:[%s1 + $0x34] sm:$0xf]
  %v39 = vld [vmem:[%s1 + $0x38] sm:$0xf]
  %v40 = vld [vmem:[%s1 + $0x3c] sm:$0xf]
  %v41 = vld [vmem:[%s1 + $0x40] sm:$0xf]
  %v42 = vld [vmem:[%s1 + $0x44] sm:$0xf]
  %v43 = vld [vmem:[%s1 + $0x48] sm:$0xf]
  %v44 = vld [vmem:[%s1 + $0x4c] sm:$0xf]
  %v45 = vld [vmem:[%s1 + $0x50] sm:$0xf]
  %v46 = vld [vmem:[%s1 + $0x54] sm:$0xf]
  %v47 = vld [vmem:[%s1 + $0x58] sm:$0xf]
  %v48 = vld [vmem:[%s1 + $0x5c] sm:$0xf]
  %v49 = vld [vmem:[%s1 + $0x60] sm:$0xf]
  %v50 = vld [vmem:[%s1 + $0x64] sm:$0xf]
  %v51 = vld [vmem:[%s1 + $0x68] sm:$0xf]
  %v52 = vld [vmem:[%s1 + $0x6c] sm:$0xf]
  %v53 = vld [vmem:[%s1 + $0x70] sm:$0xf]
  %v54 = vld [vmem:[%s1 + $0x74] sm:$0xf]
  %v55 = vld [vmem:[%s1 + $0x78] sm:$0xf]
  %v56 = vld [vmem:[%s1 + $0x7c] sm:$0xf]
  %v58 = vunpack.c.l.b16 %v24
  %v59 = vunpack.c.h.b16 %v24
  %v60 = vpack.c.b16 %v58, %v58
  %v61 = vpack.c.b16 %v59, %v59
  %v96 = vunpack.c.l.b16 %v25
  %v97 = vunpack.c.l.b16 %v26
  %v98 = vunpack.c.l.b16 %v27
  %v99 = vunpack.c.l.b16 %v28
  %v100 = vunpack.c.l.b16 %v29
  %v101 = vunpack.c.l.b16 %v30
  %v102 = vunpack.c.l.b16 %v31
  %v103 = vunpack.c.l.b16 %v32
  %v104 = vunpack.c.l.b16 %v33
  %v105 = vunpack.c.l.b16 %v34
  %v106 = vunpack.c.l.b16 %v35
  %v107 = vunpack.c.l.b16 %v36
  %v108 = vunpack.c.l.b16 %v37
  %v109 = vunpack.c.l.b16 %v38
  %v110 = vunpack.c.l.b16 %v39
  %v111 = vunpack.c.l.b16 %v40
  %v112 = vunpack.c.l.b16 %v41
  %v113 = vunpack.c.l.b16 %v42
  %v114 = vunpack.c.l.b16 %v43
  %v115 = vunpack.c.l.b16 %v44
  %v116 = vunpack.c.l.b16 %v45
  %v117 = vunpack.c.l.b16 %v46
  %v118 = vunpack.c.l.b16 %v47
  %v119 = vunpack.c.l.b16 %v48
  %v120 = vunpack.c.l.b16 %v49
  %v121 = vunpack.c.l.b16 %v50
  %v122 = vunpack.c.l.b16 %v51
  %v123 = vunpack.c.l.b16 %v52
  %v124 = vunpack.c.l.b16 %v53
  %v125 = vunpack.c.l.b16 %v54
  %v126 = vunpack.c.l.b16 %v55
  %v127 = vunpack.c.l.b16 %v56
  %v128 = vpack.c.b16 %v97, %v96
  %v129 = vpack.c.b16 %v99, %v98
  %v130 = vpack.c.b16 %v101, %v100
  %v131 = vpack.c.b16 %v103, %v102
  %v132 = vpack.c.b16 %v105, %v104
  %v133 = vpack.c.b16 %v107, %v106
  %v134 = vpack.c.b16 %v109, %v108
  %v135 = vpack.c.b16 %v111, %v110
  %v136 = vpack.c.b16 %v113, %v112
  %v137 = vpack.c.b16 %v115, %v114
  %v138 = vpack.c.b16 %v117, %v116
  %v139 = vpack.c.b16 %v119, %v118
  %v140 = vpack.c.b16 %v121, %v120
  %v141 = vpack.c.b16 %v123, %v122
  %v142 = vpack.c.b16 %v125, %v124
  %v143 = vpack.c.b16 %v127, %v126
  %160 = vmatprep.subr.bf16.mxu0 0
  %161 = vmatpush1.bf16.msra.mxu0 %v128
  %162 = vmatprep.subr.bf16.mxu0 0
  %163 = vmatpush1.bf16.msra.mxu0 %v129
  %164 = vmatprep.subr.bf16.mxu0 0
  %165 = vmatpush1.bf16.msra.mxu0 %v130
  %166 = vmatprep.subr.bf16.mxu0 0
  %167 = vmatpush1.bf16.msra.mxu0 %v131
  %168 = vmatprep.subr.bf16.mxu0 0
  %169 = vmatpush1.bf16.msra.mxu0 %v132
  %170 = vmatprep.subr.bf16.mxu0 0
  %171 = vmatpush1.bf16.msra.mxu0 %v133
  %172 = vmatprep.subr.bf16.mxu0 0
  %173 = vmatpush1.bf16.msra.mxu0 %v134
  %174 = vmatprep.subr.bf16.mxu0 0
  %175 = vmatpush1.bf16.msra.mxu0 %v135
  %176 = vmatprep.subr.bf16.mxu0 0
  %177 = vmatpush1.bf16.msra.mxu0 %v136
  %178 = vmatprep.subr.bf16.mxu0 0
  %179 = vmatpush1.bf16.msra.mxu0 %v137
  %180 = vmatprep.subr.bf16.mxu0 0
  %181 = vmatpush1.bf16.msra.mxu0 %v138
  %182 = vmatprep.subr.bf16.mxu0 0
  %183 = vmatpush1.bf16.msra.mxu0 %v139
  %184 = vmatprep.subr.bf16.mxu0 0
  %185 = vmatpush1.bf16.msra.mxu0 %v140
  %186 = vmatprep.subr.bf16.mxu0 0
  %187 = vmatpush1.bf16.msra.mxu0 %v141
  %188 = vmatprep.subr.bf16.mxu0 0
  %189 = vmatpush1.bf16.msra.mxu0 %v142
  %190 = vmatprep.subr.bf16.mxu0 0
  %191 = vmatpush1.bf16.msra.mxu0 %v143
  %192 = vmatprep.mubr.bf16.mxu0 %v61
  %193 = vmatmul.mubr.bf16.gmra.mrb[0].mxu0 %v60
  %v194 = vpop.f32.mrb[0].mxu0
  %v195 = vadd.f32 0.0, %v194
  %v196 = vpop.f32.mrb[0].mxu0
  %v197 = vpop.f32.mrb[0].mxu0
  %v198 = vpop.f32.mrb[0].mxu0
  %199 = vdwg.mxu0
  %v200 = vadd.f32 %v23, %v195
  %201 = vst [vmem:[#allocation2] sm:$0xff] %v200
  // Predicated region
  $region22: #{gmdn_transition_forward.7} parent=0 // pred_check
    %p202 = pneg %p18
  $region23: #{gmdn_transition_forward.7} parent=0 // pred_check_branch
    %204 = sbr.rel (%p202) target = $region25
  $region24: #{gmdn_transition_forward.7} parent=0 // pred_region
    %v205 = vld [vmem:[#allocation2] sm:$0xff]
    %v206 = vpack.c.bf16 %v205, %v205
    %v207 = vld [vmem:[%s2] sm:$0xf]
    %v208 = vld [vmem:[%s2 + $0x4] sm:$0xf]
    %v209 = vld [vmem:[%s2 + $0x8] sm:$0xf]
    %v210 = vld [vmem:[%s2 + $0xc] sm:$0xf]
    %v211 = vld [vmem:[%s2 + $0x10] sm:$0xf]
    %v212 = vld [vmem:[%s2 + $0x14] sm:$0xf]
    %v213 = vld [vmem:[%s2 + $0x18] sm:$0xf]
    %v214 = vld [vmem:[%s2 + $0x1c] sm:$0xf]
    %v215 = vld [vmem:[%s2 + $0x20] sm:$0xf]
    %v216 = vld [vmem:[%s2 + $0x24] sm:$0xf]
    %v217 = vld [vmem:[%s2 + $0x28] sm:$0xf]
    %v218 = vld [vmem:[%s2 + $0x2c] sm:$0xf]
    %v219 = vld [vmem:[%s2 + $0x30] sm:$0xf]
    %v220 = vld [vmem:[%s2 + $0x34] sm:$0xf]
    %v221 = vld [vmem:[%s2 + $0x38] sm:$0xf]
    %v222 = vld [vmem:[%s2 + $0x3c] sm:$0xf]
    %v223 = vld [vmem:[%s3] sm:$0x1]
    %v225 = vlaneseq
    %v226 = vshrl.u32 %v225, 7
    %v227 = vsub.s32 0, %v226
    %v228 = vrot.slane %v223, %v227
    %v246 = vunpack.c.l.b16 %v207
    %v247 = vunpack.c.l.b16 %v208
    %v248 = vunpack.c.l.b16 %v209
    %v249 = vunpack.c.l.b16 %v210
    %v250 = vunpack.c.l.b16 %v211
    %v251 = vunpack.c.l.b16 %v212
    %v252 = vunpack.c.l.b16 %v213
    %v253 = vunpack.c.l.b16 %v214
    %v254 = vunpack.c.l.b16 %v215
    %v255 = vunpack.c.l.b16 %v216
    %v256 = vunpack.c.l.b16 %v217
    %v257 = vunpack.c.l.b16 %v218
    %v258 = vunpack.c.l.b16 %v219
    %v259 = vunpack.c.l.b16 %v220
    %v260 = vunpack.c.l.b16 %v221
    %v261 = vunpack.c.l.b16 %v222
    %v262 = vpack.c.b16 %v247, %v246
    %v263 = vpack.c.b16 %v249, %v248
    %v264 = vpack.c.b16 %v251, %v250
    %v265 = vpack.c.b16 %v253, %v252
    %v266 = vpack.c.b16 %v255, %v254
    %v267 = vpack.c.b16 %v257, %v256
    %v268 = vpack.c.b16 %v259, %v258
    %v269 = vpack.c.b16 %v261, %v260
    %278 = vmatprep.subr.bf16.mxu0 0
    %279 = vmatpush1.bf16.msra.mxu0 %v262
    %280 = vmatprep.subr.bf16.mxu0 0
    %281 = vmatpush1.bf16.msra.mxu0 %v263
    %282 = vmatprep.subr.bf16.mxu0 0
    %283 = vmatpush1.bf16.msra.mxu0 %v264
    %284 = vmatprep.subr.bf16.mxu0 0
    %285 = vmatpush1.bf16.msra.mxu0 %v265
    %286 = vmatprep.subr.bf16.mxu0 0
    %287 = vmatpush1.bf16.msra.mxu0 %v266
    %288 = vmatprep.subr.bf16.mxu0 0
    %289 = vmatpush1.bf16.msra.mxu0 %v267
    %290 = vmatprep.subr.bf16.mxu0 0
    %291 = vmatpush1.bf16.msra.mxu0 %v268
    %292 = vmatprep.subr.bf16.mxu0 0
    %293 = vmatpush1.bf16.msra.mxu0 %v269
    %294 = vmatprep.subr.bf16.mxu0 0
    %295 = vmatpush1.bf16.msra.mxu0 0
    %296 = vmatprep.subr.bf16.mxu0 0
    %297 = vmatpush1.bf16.msra.mxu0 0
    %298 = vmatprep.subr.bf16.mxu0 0
    %299 = vmatpush1.bf16.msra.mxu0 0
    %300 = vmatprep.subr.bf16.mxu0 0
    %301 = vmatpush1.bf16.msra.mxu0 0
    %302 = vmatprep.subr.bf16.mxu0 0
    %303 = vmatpush1.bf16.msra.mxu0 0
    %304 = vmatprep.subr.bf16.mxu0 0
    %305 = vmatpush1.bf16.msra.mxu0 0
    %306 = vmatprep.subr.bf16.mxu0 0
    %307 = vmatpush1.bf16.msra.mxu0 0
    %308 = vmatprep.subr.bf16.mxu0 0
    %309 = vmatpush1.bf16.msra.mxu0 0
    %310 = vmatprep.mubr.bf16.mxu0 0
    %311 = vmatmul.mubr.bf16.gmra.mrb[0].mxu0 %v206
    %v312 = vpop.f32.mrb[0].mxu0
    %v313 = vadd.f32 %v228, %v312
    %v314 = vpop.f32.mrb[0].mxu0
    %v315 = vpop.f32.mrb[0].mxu0
    %v316 = vpop.f32.mrb[0].mxu0
    %317 = vdwg.mxu0
    %318 = vmax.xlane.f32.xlu0 %v313
    %v319 = vpop.xlane.xlu0 %318
    %v320 = vsub.f32 %v313, %v319
    %v321 = vmul.f32 %v320, 1.442695
    %v322 = vpow.pop %v321
    %323 = vadd.xlane.f32.xlu0 %v322
    %v324 = vpop.xlane.xlu0 %323
    %v325 = vrcp.pop %v324
    %v326 = vmul.f32 %v322, %v325
    %v327 = vmax.f32 %v326, 1e-08
    %v328 = vmin.f32 %v327, 1.0
    %329 = vst [vmem:[%s4] sm:$0xff] %v328
  $region25: #{gmdn_transition_forward.7} parent=0 // pred_fallthru
    _
  // Predicated region
  $region26: #{gmdn_transition_forward.7} parent=0 // pred_check
    _
  $region27: #{gmdn_transition_forward.7} parent=0 // pred_check_branch
    %331 = sbr.rel (0) target = $region29
  $region28: #{gmdn_transition_forward.7} parent=0 // pred_region
    _
  $region29: #{gmdn_transition_forward.7} parent=0 // pred_fallthru
    _
  // Predicated region
  $region30: #{gmdn_transition_forward.7} parent=0 // pred_check
    _
  $region31: #{gmdn_transition_forward.7} parent=0 // pred_check_branch
    %333 = sbr.rel (0) target = $region33
  $region32: #{gmdn_transition_forward.7} parent=0 // pred_region
    _
  $region33: #{gmdn_transition_forward.7} parent=0 // pred_fallthru
    _

</llo_original>
